<compile_context>
chip_gen: v7x
topology: tpu7x:2x2x1
jax: 0.10.0
libtpu: 0.0.40
codegen_flags: <defaults>
</compile_context>

<pallas_src>
import jax
import jax.numpy as jnp
from jax import lax
from jax.experimental import pallas as pl
from jax.experimental.pallas import tpu as pltpu

# small, self-consistent config
BATCH = 2
SEQ = 8
VOCAB = 64
EMB = 32          # embedding_dim
HID = 32          # hidden_dim
RNN_LAYERS = 1
TAGSET = 5
NUM_TAGS = TAGSET + 2   # tagset_size + 2 (CRF start/stop)
TAG_PAD = 128           # lane-dense padded output width


def bert_lstm_crf_kernel(
    x_ref,            # (S*B, 2E)   row block t = [x_t | x_{S-1-t}] (time-major)
    h0_ref, c0_ref,   # (B, 2H)     packed [fwd | bwd]
    wx_ref,           # (2E, 8H)    both-direction input projection, permuted gate slots
    b_ref,            # (1, 8H)     combined biases, permuted gate slots
    whh_ref,          # (2H, 8H)    block-diagonal recurrent weights
    wlin_ref,         # (2H, TAG_PAD)
    blin_ref,         # (1, TAG_PAD)
    feats_ref,        # out: (S*B, TAG_PAD)
):
    SB = x_ref.shape[0]
    B, H2 = h0_ref.shape
    H = H2 // 2
    S = SB // B

    # Hoisted input projection for BOTH directions in one lane-dense matmul.
    # Because row block t of x_ref already pairs x_t (fwd slots) with
    # x_{S-1-t} (bwd slots), gxs[t] is the complete per-step gate
    # x-contribution — entirely off the serial recurrence chain.
    gx = jnp.dot(x_ref[...], wx_ref[...],
                 preferred_element_type=jnp.float32) + b_ref[...]
    gxs = [gx[t * B:(t + 1) * B, :] for t in range(S)]

    whh = whh_ref[...]
    h = h0_ref[...]     # (B, 2H)  [h_f | h_b]
    c = c0_ref[...]     # (B, 2H)  [c_f | c_b]

    # Gate column layout (each chunk H lanes):
    #   [ i_f i_b f_f f_b o_f o_b | g_f g_b ]
    # -> one sigmoid over 6H lanes + one tanh over 2H lanes per step, and the
    #    resulting i/f/o/g come out already packed [fwd|bwd] so c/h stay packed.
    hs = []
    for t in range(S):
        # Single dependent MXU push per timestep (block-diagonal whh).
        gates = gxs[t] + jnp.dot(h, whh, preferred_element_type=jnp.float32)
        sig = jax.nn.sigmoid(gates[:, 0:6 * H])
        i = sig[:, 0:2 * H]
        f = sig[:, 2 * H:4 * H]
        o = sig[:, 4 * H:6 * H]
        g = jnp.tanh(gates[:, 6 * H:8 * H])
        c = f * c + i * g
        h = o * jnp.tanh(c)
        hs.append(h)

    # Build the time-major packed lstm_out slab (S*B, 2H) from live vregs
    # (no VMEM scratch, no masked 2-row partial stores): the fwd half of step s
    # is the hidden for time s, the bwd half of step S-1-s is the hidden for
    # time s.
    hs_fwd = jnp.concatenate(hs, axis=0)            # step-major == time-major (fwd)
    hs_bwd = jnp.concatenate(hs[::-1], axis=0)      # time-major (bwd)
    lstm = jnp.concatenate([hs_fwd[:, 0:H], hs_bwd[:, H:2 * H]], axis=1)

    # dropout1 is identity at inference; single fused lane-dense output matmul.
    feats_ref[...] = (jnp.dot(lstm, wlin_ref[...],
                              preferred_element_type=jnp.float32)
                      + blin_ref[...])


def init_params(key):
    keys = jax.random.split(key, 9)
    s = 1.0 / jnp.sqrt(jnp.float32(HID))

    def u(k, shape):
        return jax.random.uniform(k, shape, jnp.float32, -s, s)

    return dict(
        word_emb=jax.random.normal(keys[0], (VOCAB, EMB), jnp.float32) * 0.1,
        # LSTM weights stored pre-transposed: gates = x @ W_ih^T + h @ W_hh^T + b
        # columns in PyTorch gate order [i | f | g | o], each HID wide.
        wih_f=u(keys[1], (EMB, 4 * HID)),
        whh_f=u(keys[2], (HID, 4 * HID)),
        b_f=u(keys[3], (1, 4 * HID)),        # b_ih + b_hh combined
        wih_b=u(keys[4], (EMB, 4 * HID)),
        whh_b=u(keys[5], (HID, 4 * HID)),
        b_b=u(keys[6], (1, 4 * HID)),
        wlin=u(keys[7], (2 * HID, NUM_TAGS)),   # nn.Linear(2H, tagset+2).weight^T
        blin=u(keys[8], (1, NUM_TAGS)),
    )


def _gate_chunks(w):
    """Split last dim (4H, PyTorch order i,f,g,o) into H-wide chunks."""
    return (w[..., 0:HID], w[..., HID:2 * HID],
            w[..., 2 * HID:3 * HID], w[..., 3 * HID:4 * HID])


@jax.jit
def forward(sentence, params, h0, c0):
    # synthetic "BERT": deterministic embedding lookup (glue, not hot path)
    embeds = jnp.take(params["word_emb"], sentence, axis=0)        # (B, S, E)
    B, S, E = embeds.shape
    H = HID

    # --- wrapper-side layout plumbing (cheap XLA glue, outside the kernel) ---
    x_tm = jnp.transpose(embeds, (1, 0, 2))                        # (S, B, E)
    # row block t = [x_t | x_{S-1-t}] feeds both directions' gate slots at once
    x_comb = jnp.concatenate([x_tm, x_tm[::-1]], axis=-1).reshape(S * B, 2 * E)

    # Permuted gate-slot layout: [i_f i_b f_f f_b o_f o_b g_f g_b]
    i_f, f_f, g_f, o_f = _gate_chunks(params["wih_f"])
    i_b, f_b, g_b, o_b = _gate_chunks(params["wih_b"])
    zE = jnp.zeros((E, H), jnp.float32)
    wx = jnp.concatenate([
        jnp.concatenate([i_f, zE, f_f, zE, o_f, zE, g_f, zE], axis=1),
        jnp.concatenate([zE, i_b, zE, f_b, zE, o_b, zE, g_b], axis=1)],
        axis=0)                                                    # (2E, 8H)

    hi_f, hf_f, hg_f, ho_f = _gate_chunks(params["whh_f"])
    hi_b, hf_b, hg_b, ho_b = _gate_chunks(params["whh_b"])
    zH = jnp.zeros((H, H), jnp.float32)
    whh = jnp.concatenate([
        jnp.concatenate([hi_f, zH, hf_f, zH, ho_f, zH, hg_f, zH], axis=1),
        jnp.concatenate([zH, hi_b, zH, hf_b, zH, ho_b, zH, hg_b], axis=1)],
        axis=0)                                                    # (2H, 8H) block-diagonal

    bi_f, bf_f, bg_f, bo_f = _gate_chunks(params["b_f"])
    bi_b, bf_b, bg_b, bo_b = _gate_chunks(params["b_b"])
    b = jnp.concatenate([bi_f, bi_b, bf_f, bf_b, bo_f, bo_b, bg_f, bg_b],
                        axis=1)                                    # (1, 8H)

    # lane-dense output projection: zero-pad tag columns NUM_TAGS..TAG_PAD-1
    wlin = jnp.pad(params["wlin"], ((0, 0), (0, TAG_PAD - NUM_TAGS)))
    blin = jnp.pad(params["blin"], ((0, 0), (0, TAG_PAD - NUM_TAGS)))

    h0_cat = jnp.concatenate([h0[0], h0[1]], axis=1)               # (B, 2H)
    c0_cat = jnp.concatenate([c0[0], c0[1]], axis=1)

    inputs = (x_comb, h0_cat, c0_cat, wx, b, whh, wlin, blin)

    def full(shape):
        nd = len(shape)
        return pl.BlockSpec(shape, lambda i, nd=nd: (0,) * nd)

    feats_flat = pl.pallas_call(
        bert_lstm_crf_kernel,
        out_shape=jax.ShapeDtypeStruct((S * B, TAG_PAD), jnp.float32),
        grid=(1,),
        in_specs=[full(x.shape) for x in inputs],
        out_specs=full((S * B, TAG_PAD)),
        compiler_params=pltpu.CompilerParams(
            dimension_semantics=("arbitrary",)),
    )(*inputs)

    # (S*B, TAG_PAD) -> slice real tags -> (S, B, T) -> (B, S, T)
    feats = feats_flat[:, :NUM_TAGS].reshape(S, B, NUM_TAGS)
    return jnp.transpose(feats, (1, 0, 2))


def reference_forward(sentence, params, h0, c0):
    """Pure-JAX reference with identical semantics (for verification)."""
    embeds = jnp.take(params["word_emb"], sentence, axis=0)        # (B, S, E)

    def run_dir(x, h, c, wih, whh, b):
        def step(carry, x_t):
            h, c = carry
            gates = x_t @ wih + h @ whh + b
            i = jax.nn.sigmoid(gates[:, 0 * HID:1 * HID])
            f = jax.nn.sigmoid(gates[:, 1 * HID:2 * HID])
            g = jnp.tanh(gates[:, 2 * HID:3 * HID])
            o = jax.nn.sigmoid(gates[:, 3 * HID:4 * HID])
            c = f * c + i * g
            h = o * jnp.tanh(c)
            return (h, c), h
        _, hs = lax.scan(step, (h, c), jnp.transpose(x, (1, 0, 2)))
        return jnp.transpose(hs, (1, 0, 2))                        # (B, S, H)

    fwd = run_dir(embeds, h0[0], c0[0],
                  params["wih_f"], params["whh_f"], params["b_f"][0])
    bwd = run_dir(embeds[:, ::-1], h0[1], c0[1],
                  params["wih_b"], params["whh_b"], params["b_b"][0])[:, ::-1]
    lstm_out = jnp.concatenate([fwd, bwd], axis=-1)                # (B, S, 2H)
    return lstm_out @ params["wlin"] + params["blin"][0]           # (B, S, T)


if __name__ == "__main__":
    key = jax.random.PRNGKey(0)
    k_param, k_sent, k_h, k_c = jax.random.split(key, 4)

    params = init_params(k_param)
    sentence = jax.random.randint(k_sent, (BATCH, SEQ), 0, VOCAB, dtype=jnp.int32)
    # rand_init_hidden: (2 * rnn_layers, B, H) — deterministic normal draw here
    h0 = jax.random.normal(k_h, (2 * RNN_LAYERS, BATCH, HID), jnp.float32)
    c0 = jax.random.normal(k_c, (2 * RNN_LAYERS, BATCH, HID), jnp.float32)

    feats = jax.block_until_ready(forward(sentence, params, h0, c0))
    assert feats.shape == (BATCH, SEQ, NUM_TAGS)

    ref = reference_forward(sentence, params, h0, c0)
    err = float(jnp.max(jnp.abs(feats - ref)))
    assert jnp.allclose(feats, ref, rtol=1e-3, atol=1e-3), f"max abs err {err}"

    print("KERNEL_OK")
</pallas_src>

<mosaic_0001>
module attributes {stable_mosaic.version = 11 : i64} {
  func.func @bert_lstm_crf_kernel(%arg0: i32, %arg1: memref<16x64xf32, #tpu.memory_space<vmem>>, %arg2: memref<2x64xf32, #tpu.memory_space<vmem>>, %arg3: memref<2x64xf32, #tpu.memory_space<vmem>>, %arg4: memref<64x256xf32, #tpu.memory_space<vmem>>, %arg5: memref<1x256xf32, #tpu.memory_space<vmem>>, %arg6: memref<64x256xf32, #tpu.memory_space<vmem>>, %arg7: memref<64x128xf32, #tpu.memory_space<vmem>>, %arg8: memref<1x128xf32, #tpu.memory_space<vmem>>, %arg9: memref<16x128xf32, #tpu.memory_space<vmem>>) attributes {dimension_semantics = [#tpu.dimension_semantics<arbitrary>], iteration_bounds = array<i64: 1>, scalar_prefetch = 0 : i64, scratch_operands = 0 : i64, tpu.core_type = #tpu.core_type<tc>, window_params = [{pipeline_mode = #tpu.pipeline_mode<synchronous>, transform_indices = @transform_0, window_bounds = array<i64: 16, 64>}, {pipeline_mode = #tpu.pipeline_mode<synchronous>, transform_indices = @transform_1, window_bounds = array<i64: 2, 64>}, {pipeline_mode = #tpu.pipeline_mode<synchronous>, transform_indices = @transform_2, window_bounds = array<i64: 2, 64>}, {pipeline_mode = #tpu.pipeline_mode<synchronous>, transform_indices = @transform_3, window_bounds = array<i64: 64, 256>}, {pipeline_mode = #tpu.pipeline_mode<synchronous>, transform_indices = @transform_4, window_bounds = array<i64: 1, 256>}, {pipeline_mode = #tpu.pipeline_mode<synchronous>, transform_indices = @transform_5, window_bounds = array<i64: 64, 256>}, {pipeline_mode = #tpu.pipeline_mode<synchronous>, transform_indices = @transform_6, window_bounds = array<i64: 64, 128>}, {pipeline_mode = #tpu.pipeline_mode<synchronous>, transform_indices = @transform_7, window_bounds = array<i64: 1, 128>}, {pipeline_mode = #tpu.pipeline_mode<synchronous>, transform_indices = @transform_8, window_bounds = array<i64: 16, 128>}]} {
    %c0 = arith.constant 0 : index
    %c0_0 = arith.constant 0 : index
    %0 = vector.load %arg1[%c0, %c0_0] : memref<16x64xf32, #tpu.memory_space<vmem>>, vector<16x64xf32>
    %c0_1 = arith.constant 0 : index
    %c0_2 = arith.constant 0 : index
    %1 = vector.load %arg4[%c0_1, %c0_2] : memref<64x256xf32, #tpu.memory_space<vmem>>, vector<64x256xf32>
    %cst = arith.constant dense<0.000000e+00> : vector<16x256xf32>
    %2 = tpu.matmul %0, %1, %cst {dimension_numbers = #tpu.dot_dimension_numbers<[1], [0], [0], [1], [0, 0, 1, 1], [], []>} : vector<16x64xf32>, vector<64x256xf32>, vector<16x256xf32> -> vector<16x256xf32>
    %c0_3 = arith.constant 0 : index
    %c0_4 = arith.constant 0 : index
    %3 = vector.load %arg5[%c0_3, %c0_4] : memref<1x256xf32, #tpu.memory_space<vmem>>, vector<1x256xf32>
    %4 = vector.broadcast %3 : vector<1x256xf32> to vector<16x256xf32>
    %5 = arith.addf %2, %4 : vector<16x256xf32>
    %6 = vector.extract_strided_slice %5 {offsets = [0, 0], sizes = [2, 256], strides = [1, 1]} : vector<16x256xf32> to vector<2x256xf32>
    %7 = vector.extract_strided_slice %5 {offsets = [2, 0], sizes = [2, 256], strides = [1, 1]} : vector<16x256xf32> to vector<2x256xf32>
    %8 = vector.extract_strided_slice %5 {offsets = [4, 0], sizes = [2, 256], strides = [1, 1]} : vector<16x256xf32> to vector<2x256xf32>
    %9 = vector.extract_strided_slice %5 {offsets = [6, 0], sizes = [2, 256], strides = [1, 1]} : vector<16x256xf32> to vector<2x256xf32>
    %10 = vector.extract_strided_slice %5 {offsets = [8, 0], sizes = [2, 256], strides = [1, 1]} : vector<16x256xf32> to vector<2x256xf32>
    %11 = vector.extract_strided_slice %5 {offsets = [10, 0], sizes = [2, 256], strides = [1, 1]} : vector<16x256xf32> to vector<2x256xf32>
    %12 = vector.extract_strided_slice %5 {offsets = [12, 0], sizes = [2, 256], strides = [1, 1]} : vector<16x256xf32> to vector<2x256xf32>
    %13 = vector.extract_strided_slice %5 {offsets = [14, 0], sizes = [2, 256], strides = [1, 1]} : vector<16x256xf32> to vector<2x256xf32>
    %c0_5 = arith.constant 0 : index
    %c0_6 = arith.constant 0 : index
    %14 = vector.load %arg6[%c0_5, %c0_6] : memref<64x256xf32, #tpu.memory_space<vmem>>, vector<64x256xf32>
    %c0_7 = arith.constant 0 : index
    %c0_8 = arith.constant 0 : index
    %15 = vector.load %arg2[%c0_7, %c0_8] : memref<2x64xf32, #tpu.memory_space<vmem>>, vector<2x64xf32>
    %c0_9 = arith.constant 0 : index
    %c0_10 = arith.constant 0 : index
    %16 = vector.load %arg3[%c0_9, %c0_10] : memref<2x64xf32, #tpu.memory_space<vmem>>, vector<2x64xf32>
    %cst_11 = arith.constant dense<0.000000e+00> : vector<2x256xf32>
    %17 = tpu.matmul %15, %14, %cst_11 {dimension_numbers = #tpu.dot_dimension_numbers<[1], [0], [0], [1], [0, 0, 1, 1], [], []>} : vector<2x64xf32>, vector<64x256xf32>, vector<2x256xf32> -> vector<2x256xf32>
    %18 = arith.addf %6, %17 : vector<2x256xf32>
    %19 = vector.extract_strided_slice %18 {offsets = [0, 0], sizes = [2, 192], strides = [1, 1]} : vector<2x256xf32> to vector<2x192xf32>
    %20 = arith.negf %19 : vector<2x192xf32>
    %21 = math.exp %20 : vector<2x192xf32>
    %cst_12 = arith.constant 1.000000e+00 : f32
    %22 = vector.broadcast %cst_12 : f32 to vector<2x192xf32>
    %23 = arith.addf %22, %21 : vector<2x192xf32>
    %24 = arith.divf %22, %23 : vector<2x192xf32>
    %25 = vector.extract_strided_slice %24 {offsets = [0, 0], sizes = [2, 64], strides = [1, 1]} : vector<2x192xf32> to vector<2x64xf32>
    %26 = vector.extract_strided_slice %24 {offsets = [0, 64], sizes = [2, 64], strides = [1, 1]} : vector<2x192xf32> to vector<2x64xf32>
    %27 = vector.extract_strided_slice %24 {offsets = [0, 128], sizes = [2, 64], strides = [1, 1]} : vector<2x192xf32> to vector<2x64xf32>
    %28 = vector.extract_strided_slice %18 {offsets = [0, 192], sizes = [2, 64], strides = [1, 1]} : vector<2x256xf32> to vector<2x64xf32>
    %29 = math.tanh %28 : vector<2x64xf32>
    %30 = arith.mulf %26, %16 : vector<2x64xf32>
    %31 = arith.mulf %25, %29 : vector<2x64xf32>
    %32 = arith.addf %30, %31 : vector<2x64xf32>
    %33 = math.tanh %32 : vector<2x64xf32>
    %34 = arith.mulf %27, %33 : vector<2x64xf32>
    %cst_13 = arith.constant dense<0.000000e+00> : vector<2x256xf32>
    %35 = tpu.matmul %34, %14, %cst_13 {dimension_numbers = #tpu.dot_dimension_numbers<[1], [0], [0], [1], [0, 0, 1, 1], [], []>} : vector<2x64xf32>, vector<64x256xf32>, vector<2x256xf32> -> vector<2x256xf32>
    %36 = arith.addf %7, %35 : vector<2x256xf32>
    %37 = vector.extract_strided_slice %36 {offsets = [0, 0], sizes = [2, 192], strides = [1, 1]} : vector<2x256xf32> to vector<2x192xf32>
    %38 = arith.negf %37 : vector<2x192xf32>
    %39 = math.exp %38 : vector<2x192xf32>
    %cst_14 = arith.constant 1.000000e+00 : f32
    %40 = vector.broadcast %cst_14 : f32 to vector<2x192xf32>
    %41 = arith.addf %40, %39 : vector<2x192xf32>
    %42 = arith.divf %40, %41 : vector<2x192xf32>
    %43 = vector.extract_strided_slice %42 {offsets = [0, 0], sizes = [2, 64], strides = [1, 1]} : vector<2x192xf32> to vector<2x64xf32>
    %44 = vector.extract_strided_slice %42 {offsets = [0, 64], sizes = [2, 64], strides = [1, 1]} : vector<2x192xf32> to vector<2x64xf32>
    %45 = vector.extract_strided_slice %42 {offsets = [0, 128], sizes = [2, 64], strides = [1, 1]} : vector<2x192xf32> to vector<2x64xf32>
    %46 = vector.extract_strided_slice %36 {offsets = [0, 192], sizes = [2, 64], strides = [1, 1]} : vector<2x256xf32> to vector<2x64xf32>
    %47 = math.tanh %46 : vector<2x64xf32>
    %48 = arith.mulf %44, %32 : vector<2x64xf32>
    %49 = arith.mulf %43, %47 : vector<2x64xf32>
    %50 = arith.addf %48, %49 : vector<2x64xf32>
    %51 = math.tanh %50 : vector<2x64xf32>
    %52 = arith.mulf %45, %51 : vector<2x64xf32>
    %cst_15 = arith.constant dense<0.000000e+00> : vector<2x256xf32>
    %53 = tpu.matmul %52, %14, %cst_15 {dimension_numbers = #tpu.dot_dimension_numbers<[1], [0], [0], [1], [0, 0, 1, 1], [], []>} : vector<2x64xf32>, vector<64x256xf32>, vector<2x256xf32> -> vector<2x256xf32>
    %54 = arith.addf %8, %53 : vector<2x256xf32>
    %55 = vector.extract_strided_slice %54 {offsets = [0, 0], sizes = [2, 192], strides = [1, 1]} : vector<2x256xf32> to vector<2x192xf32>
    %56 = arith.negf %55 : vector<2x192xf32>
    %57 = math.exp %56 : vector<2x192xf32>
    %cst_16 = arith.constant 1.000000e+00 : f32
    %58 = vector.broadcast %cst_16 : f32 to vector<2x192xf32>
    %59 = arith.addf %58, %57 : vector<2x192xf32>
    %60 = arith.divf %58, %59 : vector<2x192xf32>
    %61 = vector.extract_strided_slice %60 {offsets = [0, 0], sizes = [2, 64], strides = [1, 1]} : vector<2x192xf32> to vector<2x64xf32>
    %62 = vector.extract_strided_slice %60 {offsets = [0, 64], sizes = [2, 64], strides = [1, 1]} : vector<2x192xf32> to vector<2x64xf32>
    %63 = vector.extract_strided_slice %60 {offsets = [0, 128], sizes = [2, 64], strides = [1, 1]} : vector<2x192xf32> to vector<2x64xf32>
    %64 = vector.extract_strided_slice %54 {offsets = [0, 192], sizes = [2, 64], strides = [1, 1]} : vector<2x256xf32> to vector<2x64xf32>
    %65 = math.tanh %64 : vector<2x64xf32>
    %66 = arith.mulf %62, %50 : vector<2x64xf32>
    %67 = arith.mulf %61, %65 : vector<2x64xf32>
    %68 = arith.addf %66, %67 : vector<2x64xf32>
    %69 = math.tanh %68 : vector<2x64xf32>
    %70 = arith.mulf %63, %69 : vector<2x64xf32>
    %cst_17 = arith.constant dense<0.000000e+00> : vector<2x256xf32>
    %71 = tpu.matmul %70, %14, %cst_17 {dimension_numbers = #tpu.dot_dimension_numbers<[1], [0], [0], [1], [0, 0, 1, 1], [], []>} : vector<2x64xf32>, vector<64x256xf32>, vector<2x256xf32> -> vector<2x256xf32>
    %72 = arith.addf %9, %71 : vector<2x256xf32>
    %73 = vector.extract_strided_slice %72 {offsets = [0, 0], sizes = [2, 192], strides = [1, 1]} : vector<2x256xf32> to vector<2x192xf32>
    %74 = arith.negf %73 : vector<2x192xf32>
    %75 = math.exp %74 : vector<2x192xf32>
    %cst_18 = arith.constant 1.000000e+00 : f32
    %76 = vector.broadcast %cst_18 : f32 to vector<2x192xf32>
    %77 = arith.addf %76, %75 : vector<2x192xf32>
    %78 = arith.divf %76, %77 : vector<2x192xf32>
    %79 = vector.extract_strided_slice %78 {offsets = [0, 0], sizes = [2, 64], strides = [1, 1]} : vector<2x192xf32> to vector<2x64xf32>
    %80 = vector.extract_strided_slice %78 {offsets = [0, 64], sizes = [2, 64], strides = [1, 1]} : vector<2x192xf32> to vector<2x64xf32>
    %81 = vector.extract_strided_slice %78 {offsets = [0, 128], sizes = [2, 64], strides = [1, 1]} : vector<2x192xf32> to vector<2x64xf32>
    %82 = vector.extract_strided_slice %72 {offsets = [0, 192], sizes = [2, 64], strides = [1, 1]} : vector<2x256xf32> to vector<2x64xf32>
    %83 = math.tanh %82 : vector<2x64xf32>
    %84 = arith.mulf %80, %68 : vector<2x64xf32>
    %85 = arith.mulf %79, %83 : vector<2x64xf32>
    %86 = arith.addf %84, %85 : vector<2x64xf32>
    %87 = math.tanh %86 : vector<2x64xf32>
    %88 = arith.mulf %81, %87 : vector<2x64xf32>
    %cst_19 = arith.constant dense<0.000000e+00> : vector<2x256xf32>
    %89 = tpu.matmul %88, %14, %cst_19 {dimension_numbers = #tpu.dot_dimension_numbers<[1], [0], [0], [1], [0, 0, 1, 1], [], []>} : vector<2x64xf32>, vector<64x256xf32>, vector<2x256xf32> -> vector<2x256xf32>
    %90 = arith.addf %10, %89 : vector<2x256xf32>
    %91 = vector.extract_strided_slice %90 {offsets = [0, 0], sizes = [2, 192], strides = [1, 1]} : vector<2x256xf32> to vector<2x192xf32>
    %92 = arith.negf %91 : vector<2x192xf32>
    %93 = math.exp %92 : vector<2x192xf32>
    %cst_20 = arith.constant 1.000000e+00 : f32
    %94 = vector.broadcast %cst_20 : f32 to vector<2x192xf32>
    %95 = arith.addf %94, %93 : vector<2x192xf32>
    %96 = arith.divf %94, %95 : vector<2x192xf32>
    %97 = vector.extract_strided_slice %96 {offsets = [0, 0], sizes = [2, 64], strides = [1, 1]} : vector<2x192xf32> to vector<2x64xf32>
    %98 = vector.extract_strided_slice %96 {offsets = [0, 64], sizes = [2, 64], strides = [1, 1]} : vector<2x192xf32> to vector<2x64xf32>
    %99 = vector.extract_strided_slice %96 {offsets = [0, 128], sizes = [2, 64], strides = [1, 1]} : vector<2x192xf32> to vector<2x64xf32>
    %100 = vector.extract_strided_slice %90 {offsets = [0, 192], sizes = [2, 64], strides = [1, 1]} : vector<2x256xf32> to vector<2x64xf32>
    %101 = math.tanh %100 : vector<2x64xf32>
    %102 = arith.mulf %98, %86 : vector<2x64xf32>
    %103 = arith.mulf %97, %101 : vector<2x64xf32>
    %104 = arith.addf %102, %103 : vector<2x64xf32>
    %105 = math.tanh %104 : vector<2x64xf32>
    %106 = arith.mulf %99, %105 : vector<2x64xf32>
    %cst_21 = arith.constant dense<0.000000e+00> : vector<2x256xf32>
    %107 = tpu.matmul %106, %14, %cst_21 {dimension_numbers = #tpu.dot_dimension_numbers<[1], [0], [0], [1], [0, 0, 1, 1], [], []>} : vector<2x64xf32>, vector<64x256xf32>, vector<2x256xf32> -> vector<2x256xf32>
    %108 = arith.addf %11, %107 : vector<2x256xf32>
    %109 = vector.extract_strided_slice %108 {offsets = [0, 0], sizes = [2, 192], strides = [1, 1]} : vector<2x256xf32> to vector<2x192xf32>
    %110 = arith.negf %109 : vector<2x192xf32>
    %111 = math.exp %110 : vector<2x192xf32>
    %cst_22 = arith.constant 1.000000e+00 : f32
    %112 = vector.broadcast %cst_22 : f32 to vector<2x192xf32>
    %113 = arith.addf %112, %111 : vector<2x192xf32>
    %114 = arith.divf %112, %113 : vector<2x192xf32>
    %115 = vector.extract_strided_slice %114 {offsets = [0, 0], sizes = [2, 64], strides = [1, 1]} : vector<2x192xf32> to vector<2x64xf32>
    %116 = vector.extract_strided_slice %114 {offsets = [0, 64], sizes = [2, 64], strides = [1, 1]} : vector<2x192xf32> to vector<2x64xf32>
    %117 = vector.extract_strided_slice %114 {offsets = [0, 128], sizes = [2, 64], strides = [1, 1]} : vector<2x192xf32> to vector<2x64xf32>
    %118 = vector.extract_strided_slice %108 {offsets = [0, 192], sizes = [2, 64], strides = [1, 1]} : vector<2x256xf32> to vector<2x64xf32>
    %119 = math.tanh %118 : vector<2x64xf32>
    %120 = arith.mulf %116, %104 : vector<2x64xf32>
    %121 = arith.mulf %115, %119 : vector<2x64xf32>
    %122 = arith.addf %120, %121 : vector<2x64xf32>
    %123 = math.tanh %122 : vector<2x64xf32>
    %124 = arith.mulf %117, %123 : vector<2x64xf32>
    %cst_23 = arith.constant dense<0.000000e+00> : vector<2x256xf32>
    %125 = tpu.matmul %124, %14, %cst_23 {dimension_numbers = #tpu.dot_dimension_numbers<[1], [0], [0], [1], [0, 0, 1, 1], [], []>} : vector<2x64xf32>, vector<64x256xf32>, vector<2x256xf32> -> vector<2x256xf32>
    %126 = arith.addf %12, %125 : vector<2x256xf32>
    %127 = vector.extract_strided_slice %126 {offsets = [0, 0], sizes = [2, 192], strides = [1, 1]} : vector<2x256xf32> to vector<2x192xf32>
    %128 = arith.negf %127 : vector<2x192xf32>
    %129 = math.exp %128 : vector<2x192xf32>
    %cst_24 = arith.constant 1.000000e+00 : f32
    %130 = vector.broadcast %cst_24 : f32 to vector<2x192xf32>
    %131 = arith.addf %130, %129 : vector<2x192xf32>
    %132 = arith.divf %130, %131 : vector<2x192xf32>
    %133 = vector.extract_strided_slice %132 {offsets = [0, 0], sizes = [2, 64], strides = [1, 1]} : vector<2x192xf32> to vector<2x64xf32>
    %134 = vector.extract_strided_slice %132 {offsets = [0, 64], sizes = [2, 64], strides = [1, 1]} : vector<2x192xf32> to vector<2x64xf32>
    %135 = vector.extract_strided_slice %132 {offsets = [0, 128], sizes = [2, 64], strides = [1, 1]} : vector<2x192xf32> to vector<2x64xf32>
    %136 = vector.extract_strided_slice %126 {offsets = [0, 192], sizes = [2, 64], strides = [1, 1]} : vector<2x256xf32> to vector<2x64xf32>
    %137 = math.tanh %136 : vector<2x64xf32>
    %138 = arith.mulf %134, %122 : vector<2x64xf32>
    %139 = arith.mulf %133, %137 : vector<2x64xf32>
    %140 = arith.addf %138, %139 : vector<2x64xf32>
    %141 = math.tanh %140 : vector<2x64xf32>
    %142 = arith.mulf %135, %141 : vector<2x64xf32>
    %cst_25 = arith.constant dense<0.000000e+00> : vector<2x256xf32>
    %143 = tpu.matmul %142, %14, %cst_25 {dimension_numbers = #tpu.dot_dimension_numbers<[1], [0], [0], [1], [0, 0, 1, 1], [], []>} : vector<2x64xf32>, vector<64x256xf32>, vector<2x256xf32> -> vector<2x256xf32>
    %144 = arith.addf %13, %143 : vector<2x256xf32>
    %145 = vector.extract_strided_slice %144 {offsets = [0, 0], sizes = [2, 192], strides = [1, 1]} : vector<2x256xf32> to vector<2x192xf32>
    %146 = arith.negf %145 : vector<2x192xf32>
    %147 = math.exp %146 : vector<2x192xf32>
    %cst_26 = arith.constant 1.000000e+00 : f32
    %148 = vector.broadcast %cst_26 : f32 to vector<2x192xf32>
    %149 = arith.addf %148, %147 : vector<2x192xf32>
    %150 = arith.divf %148, %149 : vector<2x192xf32>
    %151 = vector.extract_strided_slice %150 {offsets = [0, 0], sizes = [2, 64], strides = [1, 1]} : vector<2x192xf32> to vector<2x64xf32>
    %152 = vector.extract_strided_slice %150 {offsets = [0, 64], sizes = [2, 64], strides = [1, 1]} : vector<2x192xf32> to vector<2x64xf32>
    %153 = vector.extract_strided_slice %150 {offsets = [0, 128], sizes = [2, 64], strides = [1, 1]} : vector<2x192xf32> to vector<2x64xf32>
    %154 = vector.extract_strided_slice %144 {offsets = [0, 192], sizes = [2, 64], strides = [1, 1]} : vector<2x256xf32> to vector<2x64xf32>
    %155 = math.tanh %154 : vector<2x64xf32>
    %156 = arith.mulf %152, %140 : vector<2x64xf32>
    %157 = arith.mulf %151, %155 : vector<2x64xf32>
    %158 = arith.addf %156, %157 : vector<2x64xf32>
    %159 = math.tanh %158 : vector<2x64xf32>
    %160 = arith.mulf %153, %159 : vector<2x64xf32>
    %161 = tpu.concatenate %34, %52, %70, %88, %106, %124, %142, %160 in 0 : vector<2x64xf32>, vector<2x64xf32>, vector<2x64xf32>, vector<2x64xf32>, vector<2x64xf32>, vector<2x64xf32>, vector<2x64xf32>, vector<2x64xf32> -> vector<16x64xf32>
    %162 = tpu.concatenate %160, %142, %124, %106, %88, %70, %52, %34 in 0 : vector<2x64xf32>, vector<2x64xf32>, vector<2x64xf32>, vector<2x64xf32>, vector<2x64xf32>, vector<2x64xf32>, vector<2x64xf32>, vector<2x64xf32> -> vector<16x64xf32>
    %163 = vector.extract_strided_slice %161 {offsets = [0, 0], sizes = [16, 32], strides = [1, 1]} : vector<16x64xf32> to vector<16x32xf32>
    %164 = vector.extract_strided_slice %162 {offsets = [0, 32], sizes = [16, 32], strides = [1, 1]} : vector<16x64xf32> to vector<16x32xf32>
    %165 = tpu.concatenate %163, %164 in 1 : vector<16x32xf32>, vector<16x32xf32> -> vector<16x64xf32>
    %c0_27 = arith.constant 0 : index
    %c0_28 = arith.constant 0 : index
    %166 = vector.load %arg7[%c0_27, %c0_28] : memref<64x128xf32, #tpu.memory_space<vmem>>, vector<64x128xf32>
    %cst_29 = arith.constant dense<0.000000e+00> : vector<16x128xf32>
    %167 = tpu.matmul %165, %166, %cst_29 {dimension_numbers = #tpu.dot_dimension_numbers<[1], [0], [0], [1], [0, 0, 1, 1], [], []>} : vector<16x64xf32>, vector<64x128xf32>, vector<16x128xf32> -> vector<16x128xf32>
    %c0_30 = arith.constant 0 : index
    %c0_31 = arith.constant 0 : index
    %168 = vector.load %arg8[%c0_30, %c0_31] : memref<1x128xf32, #tpu.memory_space<vmem>>, vector<1x128xf32>
    %169 = vector.broadcast %168 : vector<1x128xf32> to vector<16x128xf32>
    %170 = arith.addf %167, %169 : vector<16x128xf32>
    %c0_32 = arith.constant 0 : index
    %c0_33 = arith.constant 0 : index
    %171 = vector.load %arg9[%c0_32, %c0_33] : memref<16x128xf32, #tpu.memory_space<vmem>>, vector<16x128xf32>
    tpu.vector_store %arg9[%c0_32, %c0_33], %170 {strides = array<i32>} : memref<16x128xf32, #tpu.memory_space<vmem>>, vector<16x128xf32>,
    return
  }
  func.func @transform_0(%arg0: i32) -> (i32, i32) {
    %c0_i32 = arith.constant 0 : i32
    %c0_i32_0 = arith.constant 0 : i32
    %c0_i32_1 = arith.constant 0 : i32
    return %c0_i32, %c0_i32_0 : i32, i32
  }
  func.func @transform_1(%arg0: i32) -> (i32, i32) {
    %c0_i32 = arith.constant 0 : i32
    %c0_i32_0 = arith.constant 0 : i32
    %c0_i32_1 = arith.constant 0 : i32
    return %c0_i32, %c0_i32_0 : i32, i32
  }
  func.func @transform_2(%arg0: i32) -> (i32, i32) {
    %c0_i32 = arith.constant 0 : i32
    %c0_i32_0 = arith.constant 0 : i32
    %c0_i32_1 = arith.constant 0 : i32
    return %c0_i32, %c0_i32_0 : i32, i32
  }
  func.func @transform_3(%arg0: i32) -> (i32, i32) {
    %c0_i32 = arith.constant 0 : i32
    %c0_i32_0 = arith.constant 0 : i32
    %c0_i32_1 = arith.constant 0 : i32
    return %c0_i32, %c0_i32_0 : i32, i32
  }
  func.func @transform_4(%arg0: i32) -> (i32, i32) {
    %c0_i32 = arith.constant 0 : i32
    %c0_i32_0 = arith.constant 0 : i32
    %c0_i32_1 = arith.constant 0 : i32
    return %c0_i32, %c0_i32_0 : i32, i32
  }
  func.func @transform_5(%arg0: i32) -> (i32, i32) {
    %c0_i32 = arith.constant 0 : i32
    %c0_i32_0 = arith.constant 0 : i32
    %c0_i32_1 = arith.constant 0 : i32
    return %c0_i32, %c0_i32_0 : i32, i32
  }
  func.func @transform_6(%arg0: i32) -> (i32, i32) {
    %c0_i32 = arith.constant 0 : i32
    %c0_i32_0 = arith.constant 0 : i32
    %c0_i32_1 = arith.constant 0 : i32
    return %c0_i32, %c0_i32_0 : i32, i32
  }
  func.func @transform_7(%arg0: i32) -> (i32, i32) {
    %c0_i32 = arith.constant 0 : i32
    %c0_i32_0 = arith.constant 0 : i32
    %c0_i32_1 = arith.constant 0 : i32
    return %c0_i32, %c0_i32_0 : i32, i32
  }
  func.func @transform_8(%arg0: i32) -> (i32, i32) {
    %c0_i32 = arith.constant 0 : i32
    %c0_i32_0 = arith.constant 0 : i32
    %c0_i32_1 = arith.constant 0 : i32
    return %c0_i32, %c0_i32_0 : i32, i32
  }
}

</mosaic_0001>

<llo_original>
// kernel: forward.1
$region0: #{forward.1}
  #allocation0 [shape = 'u32[]', space=smem, size = 0x4, offset = 0x4, fixed_abs, tag = 'smem constant byte address 0x4 - core index']
  #allocation1 [shape = 'u32[144,128]{1,0:T(1,128)}', space=vmem, size = 0x12000, scoped, tag = 'internal scratch']
  %s0 = inlined_call_operand.vmem [shape: f32[16,64], index: 0, kind: input, shape index: {}]
  %s1 = inlined_call_operand.vmem [shape: f32[2,64], index: 1, kind: input, shape index: {}]
  %s2 = inlined_call_operand.vmem [shape: f32[2,64], index: 2, kind: input, shape index: {}]
  %s3 = inlined_call_operand.vmem [shape: f32[64,256], index: 3, kind: input, shape index: {}]
  %s4 = inlined_call_operand.vmem [shape: f32[1,256], index: 4, kind: input, shape index: {}]
  %s5 = inlined_call_operand.vmem [shape: f32[64,256], index: 5, kind: input, shape index: {}]
  %s6 = inlined_call_operand.vmem [shape: f32[64,128], index: 6, kind: input, shape index: {}]
  %s7 = inlined_call_operand.vmem [shape: f32[1,128], index: 7, kind: input, shape index: {}]
  %s8 = inlined_call_operand.vmem [shape: f32[16,128], index: 8, kind: output, shape index: {}]
  %s9 = sld [smem:[#allocation0]]
  $region42: #{forward.1} parent=0
    _
  %s11 = ssub.s32 1, %s9
  %s12 = scalar_select 0, %s11, %s9
  // Predicated region
  $region2: #{forward.1} parent=0 // pred_check
    _
  $region3: #{forward.1} parent=0 // pred_check_branch
    %14 = sbr.rel (0) target = $region5
  $region4: #{forward.1} parent=0 // pred_region
    _
  $region5: #{forward.1} parent=0 // pred_fallthru
    _
  // Predicated region
  $region6: #{forward.1} parent=0 // pred_check
    _
  $region7: #{forward.1} parent=0 // pred_check_branch
    %16 = sbr.rel (0) target = $region9
  $region8: #{forward.1} parent=0 // pred_region
    _
  $region9: #{forward.1} parent=0 // pred_fallthru
    _
  // Predicated region
  $region10: #{forward.1} parent=0 // pred_check
    _
  $region11: #{forward.1} parent=0 // pred_check_branch
    %18 = sbr.rel (0) target = $region13
  $region12: #{forward.1} parent=0 // pred_region
    _
  $region13: #{forward.1} parent=0 // pred_fallthru
    _
  // Predicated region
  $region14: #{forward.1} parent=0 // pred_check
    _
  $region15: #{forward.1} parent=0 // pred_check_branch
    %20 = sbr.rel (0) target = $region17
  $region16: #{forward.1} parent=0 // pred_region
    _
  $region17: #{forward.1} parent=0 // pred_fallthru
    _
  // Predicated region
  $region18: #{forward.1} parent=0 // pred_check
    _
  $region19: #{forward.1} parent=0 // pred_check_branch
    %22 = sbr.rel (0) target = $region21
  $region20: #{forward.1} parent=0 // pred_region
    _
  $region21: #{forward.1} parent=0 // pred_fallthru
    _
  // Predicated region
  $region22: #{forward.1} parent=0 // pred_check
    _
  $region23: #{forward.1} parent=0 // pred_check_branch
    %24 = sbr.rel (0) target = $region25
  $region24: #{forward.1} parent=0 // pred_region
    _
  $region25: #{forward.1} parent=0 // pred_fallthru
    _
  // Predicated region
  $region26: #{forward.1} parent=0 // pred_check
    _
  $region27: #{forward.1} parent=0 // pred_check_branch
    %26 = sbr.rel (0) target = $region29
  $region28: #{forward.1} parent=0 // pred_region
    _
  $region29: #{forward.1} parent=0 // pred_fallthru
    _
  // Predicated region
  $region30: #{forward.1} parent=0 // pred_check
    _
  $region31: #{forward.1} parent=0 // pred_check_branch
    %28 = sbr.rel (0) target = $region33
  $region32: #{forward.1} parent=0 // pred_region
    _
  $region33: #{forward.1} parent=0 // pred_fallthru
    _
  %v29 = vld [vmem:[%s0] sm:$0xff]
  %v30 = vld [vmem:[%s0 + $0x8] sm:$0xff]
  %v31 = vld [vmem:[%s3] sm:$0xff]
  %v32 = vld [vmem:[%s3 + $0x8] sm:$0xff]
  %v33 = vld [vmem:[%s3 + $0x10] sm:$0xff]
  %v34 = vld [vmem:[%s3 + $0x18] sm:$0xff]
  %v35 = vld [vmem:[%s3 + $0x20] sm:$0xff]
  %v36 = vld [vmem:[%s3 + $0x28] sm:$0xff]
  %v37 = vld [vmem:[%s3 + $0x30] sm:$0xff]
  %v38 = vld [vmem:[%s3 + $0x38] sm:$0xff]
  %v39 = vld [vmem:[%s3 + $0x40] sm:$0xff]
  %v40 = vld [vmem:[%s3 + $0x48] sm:$0xff]
  %v41 = vld [vmem:[%s3 + $0x50] sm:$0xff]
  %v42 = vld [vmem:[%s3 + $0x58] sm:$0xff]
  %v43 = vld [vmem:[%s3 + $0x60] sm:$0xff]
  %v44 = vld [vmem:[%s3 + $0x68] sm:$0xff]
  %v45 = vld [vmem:[%s3 + $0x70] sm:$0xff]
  %v46 = vld [vmem:[%s3 + $0x78] sm:$0xff]
  %v47 = vld [vmem:[%s4] sm:$0x3]
  %v49 = vlaneseq
  %v50 = vshrl.u32 %v49, 7
  %v51 = vsub.s32 0, %v50
  %v52 = vrot.slane %v47, %v51
  %v53 = vlaneseq
  %v54 = vshrl.u32 %v53, 7
  %v55 = vsub.s32 1, %v54
  %v56 = vrot.slane %v47, %v55
  %vm59 = vcmask 523264
  %v61 = vsel %vm59, %v29, 0
  %v64 = vsel %vm59, %v30, 0
  %66 = vmatprep.subr.mxu0 %v32
  %67 = vmatpush1.msra.mxu0 %v31
  %68 = vmatprep.subr.mxu0 %v34
  %69 = vmatpush1.msra.mxu0 %v33
  %70 = vmatprep.subr.mxu0 %v36
  %71 = vmatpush1.msra.mxu0 %v35
  %72 = vmatprep.subr.mxu0 %v38
  %73 = vmatpush1.msra.mxu0 %v37
  %74 = vmatprep.subr.mxu0 %v40
  %75 = vmatpush1.msra.mxu0 %v39
  %76 = vmatprep.subr.mxu0 %v42
  %77 = vmatpush1.msra.mxu0 %v41
  %78 = vmatprep.subr.mxu0 %v44
  %79 = vmatpush1.msra.mxu0 %v43
  %80 = vmatprep.subr.mxu0 %v46
  %81 = vmatpush1.msra.mxu0 %v45
  %82 = vmatprep.subr.mxu0 0.0
  %83 = vmatpush1.msra.mxu0 0.0
  %84 = vmatprep.subr.mxu0 0.0
  %85 = vmatpush1.msra.mxu0 0.0
  %86 = vmatprep.subr.mxu0 0.0
  %87 = vmatpush1.msra.mxu0 0.0
  %88 = vmatprep.subr.mxu0 0.0
  %89 = vmatpush1.msra.mxu0 0.0
  %90 = vmatprep.subr.mxu0 0.0
  %91 = vmatpush1.msra.mxu0 0.0
  %92 = vmatprep.subr.mxu0 0.0
  %93 = vmatpush1.msra.mxu0 0.0
  %94 = vmatprep.subr.mxu0 0.0
  %95 = vmatpush1.msra.mxu0 0.0
  %96 = vmatprep.subr.mxu0 0.0
  %97 = vmatpush1.msra.mxu0 0.0
  %98 = vmatprep.subr.mxu0 0.0
  %99 = vmatpush1.msra.mxu0 0.0
  %100 = vmatprep.subr.mxu0 0.0
  %101 = vmatpush1.msra.mxu0 0.0
  %102 = vmatprep.subr.mxu0 0.0
  %103 = vmatpush1.msra.mxu0 0.0
  %104 = vmatprep.subr.mxu0 0.0
  %105 = vmatpush1.msra.mxu0 0.0
  %106 = vmatprep.subr.mxu0 0.0
  %107 = vmatpush1.msra.mxu0 0.0
  %108 = vmatprep.subr.mxu0 0.0
  %109 = vmatpush1.msra.mxu0 0.0
  %110 = vmatprep.subr.mxu0 0.0
  %111 = vmatpush1.msra.mxu0 0.0
  %112 = vmatprep.subr.mxu0 0.0
  %113 = vmatpush1.msra.mxu0 0.0
  %114 = vmatprep.subr.mxu0 0.0
  %115 = vmatpush1.msra.mxu0 0.0
  %116 = vmatprep.subr.mxu0 0.0
  %117 = vmatpush1.msra.mxu0 0.0
  %118 = vmatprep.subr.mxu0 0.0
  %119 = vmatpush1.msra.mxu0 0.0
  %120 = vmatprep.subr.mxu0 0.0
  %121 = vmatpush1.msra.mxu0 0.0
  %122 = vmatprep.subr.mxu0 0.0
  %123 = vmatpush1.msra.mxu0 0.0
  %124 = vmatprep.subr.mxu0 0.0
  %125 = vmatpush1.msra.mxu0 0.0
  %126 = vmatprep.subr.mxu0 0.0
  %127 = vmatpush1.msra.mxu0 0.0
  %128 = vmatprep.subr.mxu0 0.0
  %129 = vmatpush1.msra.mxu0 0.0
  %130 = vmatprep.mubr.f32.mxu0 0.0
  %131 = vmatmul.mubr.f32.gmra.mrb[0].mxu0 %v61
  %v132 = vpop.f32.mrb[0].mxu0
  %v133 = vadd.f32 %v52, %v132
  %v134 = vpop.f32.mrb[0].mxu0
  %v135 = vadd.f32 %v56, %v134
  %136 = vmatprep.mubr.f32.mxu0 0.0
  %137 = vmatmul.mubr.f32.gmra.mrb[0].mxu0 %v64
  %v138 = vpop.f32.mrb[0].mxu0
  %v139 = vadd.f32 %v52, %v138
  %v140 = vpop.f32.mrb[0].mxu0
  %v141 = vadd.f32 %v56, %v140
  %142 = vdwg.mxu0
  %v143 = vld [vmem:[%s5] sm:$0xff]
  %v144 = vld [vmem:[%s5 + $0x8] sm:$0xff]
  %v145 = vld [vmem:[%s5 + $0x10] sm:$0xff]
  %v146 = vld [vmem:[%s5 + $0x18] sm:$0xff]
  %v147 = vld [vmem:[%s5 + $0x20] sm:$0xff]
  %v148 = vld [vmem:[%s5 + $0x28] sm:$0xff]
  %v149 = vld [vmem:[%s5 + $0x30] sm:$0xff]
  %v150 = vld [vmem:[%s5 + $0x38] sm:$0xff]
  %v151 = vld [vmem:[%s5 + $0x40] sm:$0xff]
  %v152 = vld [vmem:[%s5 + $0x48] sm:$0xff]
  %v153 = vld [vmem:[%s5 + $0x50] sm:$0xff]
  %v154 = vld [vmem:[%s5 + $0x58] sm:$0xff]
  %v155 = vld [vmem:[%s5 + $0x60] sm:$0xff]
  %v156 = vld [vmem:[%s5 + $0x68] sm:$0xff]
  %v157 = vld [vmem:[%s5 + $0x70] sm:$0xff]
  %v158 = vld [vmem:[%s5 + $0x78] sm:$0xff]
  %v159 = vld [vmem:[%s1] sm:$0x3]
  %v160 = vld [vmem:[%s2] sm:$0x3]
  %v162 = vsel %vm59, %v159, 0
  %164 = vmatprep.subr.mxu0 %v144
  %165 = vmatpush1.msra.mxu0 %v143
  %166 = vmatprep.subr.mxu0 %v146
  %167 = vmatpush1.msra.mxu0 %v145
  %168 = vmatprep.subr.mxu0 %v148
  %169 = vmatpush1.msra.mxu0 %v147
  %170 = vmatprep.subr.mxu0 %v150
  %171 = vmatpush1.msra.mxu0 %v149
  %172 = vmatprep.subr.mxu0 %v152
  %173 = vmatpush1.msra.mxu0 %v151
  %174 = vmatprep.subr.mxu0 %v154
  %175 = vmatpush1.msra.mxu0 %v153
  %176 = vmatprep.subr.mxu0 %v156
  %177 = vmatpush1.msra.mxu0 %v155
  %178 = vmatprep.subr.mxu0 %v158
  %179 = vmatpush1.msra.mxu0 %v157
  %180 = vmatprep.subr.mxu0 0.0
  %181 = vmatpush1.msra.mxu0 0.0
  %182 = vmatprep.subr.mxu0 0.0
  %183 = vmatpush1.msra.mxu0 0.0
  %184 = vmatprep.subr.mxu0 0.0
  %185 = vmatpush1.msra.mxu0 0.0
  %186 = vmatprep.subr.mxu0 0.0
  %187 = vmatpush1.msra.mxu0 0.0
  %188 = vmatprep.subr.mxu0 0.0
  %189 = vmatpush1.msra.mxu0 0.0
  %190 = vmatprep.subr.mxu0 0.0
  %191 = vmatpush1.msra.mxu0 0.0
  %192 = vmatprep.subr.mxu0 0.0
  %193 = vmatpush1.msra.mxu0 0.0
  %194 = vmatprep.subr.mxu0 0.0
  %195 = vmatpush1.msra.mxu0 0.0
  %196 = vmatprep.subr.mxu0 0.0
  %197 = vmatpush1.msra.mxu0 0.0
  %198 = vmatprep.subr.mxu0 0.0
  %199 = vmatpush1.msra.mxu0 0.0
  %200 = vmatprep.subr.mxu0 0.0
  %201 = vmatpush1.msra.mxu0 0.0
  %202 = vmatprep.subr.mxu0 0.0
  %203 = vmatpush1.msra.mxu0 0.0
  %204 = vmatprep.subr.mxu0 0.0
  %205 = vmatpush1.msra.mxu0 0.0
  %206 = vmatprep.subr.mxu0 0.0
  %207 = vmatpush1.msra.mxu0 0.0
  %208 = vmatprep.subr.mxu0 0.0
  %209 = vmatpush1.msra.mxu0 0.0
  %210 = vmatprep.subr.mxu0 0.0
  %211 = vmatpush1.msra.mxu0 0.0
  %212 = vmatprep.subr.mxu0 0.0
  %213 = vmatpush1.msra.mxu0 0.0
  %214 = vmatprep.subr.mxu0 0.0
  %215 = vmatpush1.msra.mxu0 0.0
  %216 = vmatprep.subr.mxu0 0.0
  %217 = vmatpush1.msra.mxu0 0.0
  %218 = vmatprep.subr.mxu0 0.0
  %219 = vmatpush1.msra.mxu0 0.0
  %220 = vmatprep.subr.mxu0 0.0
  %221 = vmatpush1.msra.mxu0 0.0
  %222 = vmatprep.subr.mxu0 0.0
  %223 = vmatpush1.msra.mxu0 0.0
  %224 = vmatprep.subr.mxu0 0.0
  %225 = vmatpush1.msra.mxu0 0.0
  %226 = vmatprep.subr.mxu0 0.0
  %227 = vmatpush1.msra.mxu0 0.0
  %228 = vmatprep.mubr.f32.mxu0 0.0
  %229 = vmatmul.mubr.f32.gmra.mrb[0].mxu0 %v162
  %v230 = vpop.f32.mrb[0].mxu0
  %v231 = vadd.f32 0.0, %v230
  %v232 = vpop.f32.mrb[0].mxu0
  %v233 = vadd.f32 0.0, %v232
  %234 = vdwg.mxu0
  %v235 = vadd.f32 %v133, %v231
  %v236 = vadd.f32 %v135, %v233
  %v237 = vxor.u32 %v235, 2147483648
  %v238 = vxor.u32 %v236, 2147483648
  %v239 = vmul.f32 %v237, 1.442695
  %v240 = vpow.pop %v239
  %v241 = vmul.f32 %v238, 1.442695
  %v242 = vpow.pop %v241
  %v243 = vadd.f32 %v240, 1.0
  %v244 = vadd.f32 %v242, 1.0
  %v245 = vrcp.pop %v243
  %v246 = vmul.f32 1.0, %v245
  %v247 = vrcp.pop %v244
  %v248 = vmul.f32 1.0, %v247
  %v249 = vtanh.pop %v236
  %251 = vrot.lane.b32.xlu0 %v160, 64
  %v252 = vpop.permute.xlu0 %251
  %v254 = vmul.f32 %v246, %v252
  %256 = vrot.lane.b32.xlu0 %v249, 64
  %v257 = vpop.permute.xlu0 %256
  %v259 = vmul.f32 %v246, %v257
  %261 = vrot.lane.b32.xlu0 %v259, 64
  %v262 = vpop.permute.xlu0 %261
  %v264 = vadd.f32 %v254, %v262
  %v265 = vtanh.pop %v264
  %267 = vrot.lane.b32.xlu0 %v265, 64
  %v268 = vpop.permute.xlu0 %267
  %v270 = vmul.f32 %v248, %v268
  %v272 = vsel %vm59, %v270, 0
  %274 = vmatprep.subr.mxu0 %v144
  %275 = vmatpush1.msra.mxu0 %v143
  %276 = vmatprep.subr.mxu0 %v146
  %277 = vmatpush1.msra.mxu0 %v145
  %278 = vmatprep.subr.mxu0 %v148
  %279 = vmatpush1.msra.mxu0 %v147
  %280 = vmatprep.subr.mxu0 %v150
  %281 = vmatpush1.msra.mxu0 %v149
  %282 = vmatprep.subr.mxu0 %v152
  %283 = vmatpush1.msra.mxu0 %v151
  %284 = vmatprep.subr.mxu0 %v154
  %285 = vmatpush1.msra.mxu0 %v153
  %286 = vmatprep.subr.mxu0 %v156
  %287 = vmatpush1.msra.mxu0 %v155
  %288 = vmatprep.subr.mxu0 %v158
  %289 = vmatpush1.msra.mxu0 %v157
  %290 = vmatprep.subr.mxu0 0.0
  %291 = vmatpush1.msra.mxu0 0.0
  %292 = vmatprep.subr.mxu0 0.0
  %293 = vmatpush1.msra.mxu0 0.0
  %294 = vmatprep.subr.mxu0 0.0
  %295 = vmatpush1.msra.mxu0 0.0
  %296 = vmatprep.subr.mxu0 0.0
  %297 = vmatpush1.msra.mxu0 0.0
  %298 = vmatprep.subr.mxu0 0.0
  %299 = vmatpush1.msra.mxu0 0.0
  %300 = vmatprep.subr.mxu0 0.0
  %301 = vmatpush1.msra.mxu0 0.0
  %302 = vmatprep.subr.mxu0 0.0
  %303 = vmatpush1.msra.mxu0 0.0
  %304 = vmatprep.subr.mxu0 0.0
  %305 = vmatpush1.msra.mxu0 0.0
  %306 = vmatprep.subr.mxu0 0.0
  %307 = vmatpush1.msra.mxu0 0.0
  %308 = vmatprep.subr.mxu0 0.0
  %309 = vmatpush1.msra.mxu0 0.0
  %310 = vmatprep.subr.mxu0 0.0
  %311 = vmatpush1.msra.mxu0 0.0
  %312 = vmatprep.subr.mxu0 0.0
  %313 = vmatpush1.msra.mxu0 0.0
  %314 = vmatprep.subr.mxu0 0.0
  %315 = vmatpush1.msra.mxu0 0.0
  %316 = vmatprep.subr.mxu0 0.0
  %317 = vmatpush1.msra.mxu0 0.0
  %318 = vmatprep.subr.mxu0 0.0
  %319 = vmatpush1.msra.mxu0 0.0
  %320 = vmatprep.subr.mxu0 0.0
  %321 = vmatpush1.msra.mxu0 0.0
  %322 = vmatprep.subr.mxu0 0.0
  %323 = vmatpush1.msra.mxu0 0.0
  %324 = vmatprep.subr.mxu0 0.0
  %325 = vmatpush1.msra.mxu0 0.0
  %326 = vmatprep.subr.mxu0 0.0
  %327 = vmatpush1.msra.mxu0 0.0
  %328 = vmatprep.subr.mxu0 0.0
  %329 = vmatpush1.msra.mxu0 0.0
  %330 = vmatprep.subr.mxu0 0.0
  %331 = vmatpush1.msra.mxu0 0.0
  %332 = vmatprep.subr.mxu0 0.0
  %333 = vmatpush1.msra.mxu0 0.0
  %334 = vmatprep.subr.mxu0 0.0
  %335 = vmatpush1.msra.mxu0 0.0
  %336 = vmatprep.subr.mxu0 0.0
  %337 = vmatpush1.msra.mxu0 0.0
  %338 = vmatprep.mubr.f32.mxu0 0.0
  %339 = vmatmul.mubr.f32.gmra.mrb[0].mxu0 %v272
  %v340 = vpop.f32.mrb[0].mxu0
  %v341 = vadd.f32 0.0, %v340
  %v342 = vpop.f32.mrb[0].mxu0
  %v343 = vadd.f32 0.0, %v342
  %344 = vdwg.mxu0
  %v347 = vrot.slane %v341, 6
  %v348 = vrot.slane %v343, 6
  %v351 = vadd.f32 %v133, %v347
  %v352 = vadd.f32 %v135, %v348
  %v353 = vxor.u32 %v351, 2147483648
  %v354 = vxor.u32 %v352, 2147483648
  %v355 = vmul.f32 %v353, 1.442695
  %v356 = vpow.pop %v355
  %v357 = vmul.f32 %v354, 1.442695
  %v358 = vpow.pop %v357
  %v359 = vadd.f32 %v356, 1.0
  %v360 = vadd.f32 %v358, 1.0
  %v361 = vrcp.pop %v359
  %v362 = vmul.f32 1.0, %v361
  %v363 = vrcp.pop %v360
  %v364 = vmul.f32 1.0, %v363
  %v365 = vtanh.pop %v352
  %v367 = vrot.slane %v264, 6
  %v369 = vmul.f32 %v362, %v367
  %371 = vrot.lane.b32.xlu0 %v365, 64
  %v372 = vpop.permute.xlu0 %371
  %v374 = vmul.f32 %v362, %v372
  %376 = vrot.lane.b32.xlu0 %v374, 64
  %v377 = vpop.permute.xlu0 %376
  %v379 = vadd.f32 %v369, %v377
  %v380 = vtanh.pop %v379
  %382 = vrot.lane.b32.xlu0 %v380, 64
  %v383 = vpop.permute.xlu0 %382
  %v385 = vmul.f32 %v364, %v383
  %v387 = vrot.slane %v385, 2
  %v388 = vsel %vm59, %v387, 0
  %390 = vmatprep.subr.mxu0 %v144
  %391 = vmatpush1.msra.mxu0 %v143
  %392 = vmatprep.subr.mxu0 %v146
  %393 = vmatpush1.msra.mxu0 %v145
  %394 = vmatprep.subr.mxu0 %v148
  %395 = vmatpush1.msra.mxu0 %v147
  %396 = vmatprep.subr.mxu0 %v150
  %397 = vmatpush1.msra.mxu0 %v149
  %398 = vmatprep.subr.mxu0 %v152
  %399 = vmatpush1.msra.mxu0 %v151
  %400 = vmatprep.subr.mxu0 %v154
  %401 = vmatpush1.msra.mxu0 %v153
  %402 = vmatprep.subr.mxu0 %v156
  %403 = vmatpush1.msra.mxu0 %v155
  %404 = vmatprep.subr.mxu0 %v158
  %405 = vmatpush1.msra.mxu0 %v157
  %406 = vmatprep.subr.mxu0 0.0
  %407 = vmatpush1.msra.mxu0 0.0
  %408 = vmatprep.subr.mxu0 0.0
  %409 = vmatpush1.msra.mxu0 0.0
  %410 = vmatprep.subr.mxu0 0.0
  %411 = vmatpush1.msra.mxu0 0.0
  %412 = vmatprep.subr.mxu0 0.0
  %413 = vmatpush1.msra.mxu0 0.0
  %414 = vmatprep.subr.mxu0 0.0
  %415 = vmatpush1.msra.mxu0 0.0
  %416 = vmatprep.subr.mxu0 0.0
  %417 = vmatpush1.msra.mxu0 0.0
  %418 = vmatprep.subr.mxu0 0.0
  %419 = vmatpush1.msra.mxu0 0.0
  %420 = vmatprep.subr.mxu0 0.0
  %421 = vmatpush1.msra.mxu0 0.0
  %422 = vmatprep.subr.mxu0 0.0
  %423 = vmatpush1.msra.mxu0 0.0
  %424 = vmatprep.subr.mxu0 0.0
  %425 = vmatpush1.msra.mxu0 0.0
  %426 = vmatprep.subr.mxu0 0.0
  %427 = vmatpush1.msra.mxu0 0.0
  %428 = vmatprep.subr.mxu0 0.0
  %429 = vmatpush1.msra.mxu0 0.0
  %430 = vmatprep.subr.mxu0 0.0
  %431 = vmatpush1.msra.mxu0 0.0
  %432 = vmatprep.subr.mxu0 0.0
  %433 = vmatpush1.msra.mxu0 0.0
  %434 = vmatprep.subr.mxu0 0.0
  %435 = vmatpush1.msra.mxu0 0.0
  %436 = vmatprep.subr.mxu0 0.0
  %437 = vmatpush1.msra.mxu0 0.0
  %438 = vmatprep.subr.mxu0 0.0
  %439 = vmatpush1.msra.mxu0 0.0
  %440 = vmatprep.subr.mxu0 0.0
  %441 = vmatpush1.msra.mxu0 0.0
  %442 = vmatprep.subr.mxu0 0.0
  %443 = vmatpush1.msra.mxu0 0.0
  %444 = vmatprep.subr.mxu0 0.0
  %445 = vmatpush1.msra.mxu0 0.0
  %446 = vmatprep.subr.mxu0 0.0
  %447 = vmatpush1.msra.mxu0 0.0
  %448 = vmatprep.subr.mxu0 0.0
  %449 = vmatpush1.msra.mxu0 0.0
  %450 = vmatprep.subr.mxu0 0.0
  %451 = vmatpush1.msra.mxu0 0.0
  %452 = vmatprep.subr.mxu0 0.0
  %453 = vmatpush1.msra.mxu0 0.0
  %454 = vmatprep.mubr.f32.mxu0 0.0
  %455 = vmatmul.mubr.f32.gmra.mrb[0].mxu0 %v388
  %v456 = vpop.f32.mrb[0].mxu0
  %v457 = vadd.f32 0.0, %v456
  %v458 = vpop.f32.mrb[0].mxu0
  %v459 = vadd.f32 0.0, %v458
  %460 = vdwg.mxu0
  %v463 = vrot.slane %v457, 4
  %v464 = vrot.slane %v459, 4
  %v467 = vadd.f32 %v133, %v463
  %v468 = vadd.f32 %v135, %v464
  %v469 = vxor.u32 %v467, 2147483648
  %v470 = vxor.u32 %v468, 2147483648
  %v471 = vmul.f32 %v469, 1.442695
  %v472 = vpow.pop %v471
  %v473 = vmul.f32 %v470, 1.442695
  %v474 = vpow.pop %v473
  %v475 = vadd.f32 %v472, 1.0
  %v476 = vadd.f32 %v474, 1.0
  %v477 = vrcp.pop %v475
  %v478 = vmul.f32 1.0, %v477
  %v479 = vrcp.pop %v476
  %v480 = vmul.f32 1.0, %v479
  %v481 = vtanh.pop %v468
  %v483 = vrot.slane %v379, 6
  %v485 = vmul.f32 %v478, %v483
  %487 = vrot.lane.b32.xlu0 %v481, 64
  %v488 = vpop.permute.xlu0 %487
  %v490 = vmul.f32 %v478, %v488
  %492 = vrot.lane.b32.xlu0 %v490, 64
  %v493 = vpop.permute.xlu0 %492
  %v495 = vadd.f32 %v485, %v493
  %v496 = vtanh.pop %v495
  %498 = vrot.lane.b32.xlu0 %v496, 64
  %v499 = vpop.permute.xlu0 %498
  %v501 = vmul.f32 %v480, %v499
  %v503 = vrot.slane %v501, 4
  %v504 = vsel %vm59, %v503, 0
  %506 = vmatprep.subr.mxu0 %v144
  %507 = vmatpush1.msra.mxu0 %v143
  %508 = vmatprep.subr.mxu0 %v146
  %509 = vmatpush1.msra.mxu0 %v145
  %510 = vmatprep.subr.mxu0 %v148
  %511 = vmatpush1.msra.mxu0 %v147
  %512 = vmatprep.subr.mxu0 %v150
  %513 = vmatpush1.msra.mxu0 %v149
  %514 = vmatprep.subr.mxu0 %v152
  %515 = vmatpush1.msra.mxu0 %v151
  %516 = vmatprep.subr.mxu0 %v154
  %517 = vmatpush1.msra.mxu0 %v153
  %518 = vmatprep.subr.mxu0 %v156
  %519 = vmatpush1.msra.mxu0 %v155
  %520 = vmatprep.subr.mxu0 %v158
  %521 = vmatpush1.msra.mxu0 %v157
  %522 = vmatprep.subr.mxu0 0.0
  %523 = vmatpush1.msra.mxu0 0.0
  %524 = vmatprep.subr.mxu0 0.0
  %525 = vmatpush1.msra.mxu0 0.0
  %526 = vmatprep.subr.mxu0 0.0
  %527 = vmatpush1.msra.mxu0 0.0
  %528 = vmatprep.subr.mxu0 0.0
  %529 = vmatpush1.msra.mxu0 0.0
  %530 = vmatprep.subr.mxu0 0.0
  %531 = vmatpush1.msra.mxu0 0.0
  %532 = vmatprep.subr.mxu0 0.0
  %533 = vmatpush1.msra.mxu0 0.0
  %534 = vmatprep.subr.mxu0 0.0
  %535 = vmatpush1.msra.mxu0 0.0
  %536 = vmatprep.subr.mxu0 0.0
  %537 = vmatpush1.msra.mxu0 0.0
  %538 = vmatprep.subr.mxu0 0.0
  %539 = vmatpush1.msra.mxu0 0.0
  %540 = vmatprep.subr.mxu0 0.0
  %541 = vmatpush1.msra.mxu0 0.0
  %542 = vmatprep.subr.mxu0 0.0
  %543 = vmatpush1.msra.mxu0 0.0
  %544 = vmatprep.subr.mxu0 0.0
  %545 = vmatpush1.msra.mxu0 0.0
  %546 = vmatprep.subr.mxu0 0.0
  %547 = vmatpush1.msra.mxu0 0.0
  %548 = vmatprep.subr.mxu0 0.0
  %549 = vmatpush1.msra.mxu0 0.0
  %550 = vmatprep.subr.mxu0 0.0
  %551 = vmatpush1.msra.mxu0 0.0
  %552 = vmatprep.subr.mxu0 0.0
  %553 = vmatpush1.msra.mxu0 0.0
  %554 = vmatprep.subr.mxu0 0.0
  %555 = vmatpush1.msra.mxu0 0.0
  %556 = vmatprep.subr.mxu0 0.0
  %557 = vmatpush1.msra.mxu0 0.0
  %558 = vmatprep.subr.mxu0 0.0
  %559 = vmatpush1.msra.mxu0 0.0
  %560 = vmatprep.subr.mxu0 0.0
  %561 = vmatpush1.msra.mxu0 0.0
  %562 = vmatprep.subr.mxu0 0.0
  %563 = vmatpush1.msra.mxu0 0.0
  %564 = vmatprep.subr.mxu0 0.0
  %565 = vmatpush1.msra.mxu0 0.0
  %566 = vmatprep.subr.mxu0 0.0
  %567 = vmatpush1.msra.mxu0 0.0
  %568 = vmatprep.subr.mxu0 0.0
  %569 = vmatpush1.msra.mxu0 0.0
  %570 = vmatprep.mubr.f32.mxu0 0.0
  %571 = vmatmul.mubr.f32.gmra.mrb[0].mxu0 %v504
  %v572 = vpop.f32.mrb[0].mxu0
  %v573 = vadd.f32 0.0, %v572
  %v574 = vpop.f32.mrb[0].mxu0
  %v575 = vadd.f32 0.0, %v574
  %576 = vdwg.mxu0
  %v579 = vrot.slane %v573, 2
  %v580 = vrot.slane %v575, 2
  %v583 = vadd.f32 %v133, %v579
  %v584 = vadd.f32 %v135, %v580
  %v585 = vxor.u32 %v583, 2147483648
  %v586 = vxor.u32 %v584, 2147483648
  %v587 = vmul.f32 %v585, 1.442695
  %v588 = vpow.pop %v587
  %v589 = vmul.f32 %v586, 1.442695
  %v590 = vpow.pop %v589
  %v591 = vadd.f32 %v588, 1.0
  %v592 = vadd.f32 %v590, 1.0
  %v593 = vrcp.pop %v591
  %v594 = vmul.f32 1.0, %v593
  %v595 = vrcp.pop %v592
  %v596 = vmul.f32 1.0, %v595
  %v597 = vtanh.pop %v584
  %v599 = vrot.slane %v495, 6
  %v601 = vmul.f32 %v594, %v599
  %603 = vrot.lane.b32.xlu0 %v597, 64
  %v604 = vpop.permute.xlu0 %603
  %v606 = vmul.f32 %v594, %v604
  %608 = vrot.lane.b32.xlu0 %v606, 64
  %v609 = vpop.permute.xlu0 %608
  %v611 = vadd.f32 %v601, %v609
  %v612 = vtanh.pop %v611
  %614 = vrot.lane.b32.xlu0 %v612, 64
  %v615 = vpop.permute.xlu0 %614
  %v617 = vmul.f32 %v596, %v615
  %v619 = vrot.slane %v617, 6
  %v620 = vsel %vm59, %v619, 0
  %622 = vmatprep.subr.mxu0 %v144
  %623 = vmatpush1.msra.mxu0 %v143
  %624 = vmatprep.subr.mxu0 %v146
  %625 = vmatpush1.msra.mxu0 %v145
  %626 = vmatprep.subr.mxu0 %v148
  %627 = vmatpush1.msra.mxu0 %v147
  %628 = vmatprep.subr.mxu0 %v150
  %629 = vmatpush1.msra.mxu0 %v149
  %630 = vmatprep.subr.mxu0 %v152
  %631 = vmatpush1.msra.mxu0 %v151
  %632 = vmatprep.subr.mxu0 %v154
  %633 = vmatpush1.msra.mxu0 %v153
  %634 = vmatprep.subr.mxu0 %v156
  %635 = vmatpush1.msra.mxu0 %v155
  %636 = vmatprep.subr.mxu0 %v158
  %637 = vmatpush1.msra.mxu0 %v157
  %638 = vmatprep.subr.mxu0 0.0
  %639 = vmatpush1.msra.mxu0 0.0
  %640 = vmatprep.subr.mxu0 0.0
  %641 = vmatpush1.msra.mxu0 0.0
  %642 = vmatprep.subr.mxu0 0.0
  %643 = vmatpush1.msra.mxu0 0.0
  %644 = vmatprep.subr.mxu0 0.0
  %645 = vmatpush1.msra.mxu0 0.0
  %646 = vmatprep.subr.mxu0 0.0
  %647 = vmatpush1.msra.mxu0 0.0
  %648 = vmatprep.subr.mxu0 0.0
  %649 = vmatpush1.msra.mxu0 0.0
  %650 = vmatprep.subr.mxu0 0.0
  %651 = vmatpush1.msra.mxu0 0.0
  %652 = vmatprep.subr.mxu0 0.0
  %653 = vmatpush1.msra.mxu0 0.0
  %654 = vmatprep.subr.mxu0 0.0
  %655 = vmatpush1.msra.mxu0 0.0
  %656 = vmatprep.subr.mxu0 0.0
  %657 = vmatpush1.msra.mxu0 0.0
  %658 = vmatprep.subr.mxu0 0.0
  %659 = vmatpush1.msra.mxu0 0.0
  %660 = vmatprep.subr.mxu0 0.0
  %661 = vmatpush1.msra.mxu0 0.0
  %662 = vmatprep.subr.mxu0 0.0
  %663 = vmatpush1.msra.mxu0 0.0
  %664 = vmatprep.subr.mxu0 0.0
  %665 = vmatpush1.msra.mxu0 0.0
  %666 = vmatprep.subr.mxu0 0.0
  %667 = vmatpush1.msra.mxu0 0.0
  %668 = vmatprep.subr.mxu0 0.0
  %669 = vmatpush1.msra.mxu0 0.0
  %670 = vmatprep.subr.mxu0 0.0
  %671 = vmatpush1.msra.mxu0 0.0
  %672 = vmatprep.subr.mxu0 0.0
  %673 = vmatpush1.msra.mxu0 0.0
  %674 = vmatprep.subr.mxu0 0.0
  %675 = vmatpush1.msra.mxu0 0.0
  %676 = vmatprep.subr.mxu0 0.0
  %677 = vmatpush1.msra.mxu0 0.0
  %678 = vmatprep.subr.mxu0 0.0
  %679 = vmatpush1.msra.mxu0 0.0
  %680 = vmatprep.subr.mxu0 0.0
  %681 = vmatpush1.msra.mxu0 0.0
  %682 = vmatprep.subr.mxu0 0.0
  %683 = vmatpush1.msra.mxu0 0.0
  %684 = vmatprep.subr.mxu0 0.0
  %685 = vmatpush1.msra.mxu0 0.0
  %686 = vmatprep.mubr.f32.mxu0 0.0
  %687 = vmatmul.mubr.f32.gmra.mrb[0].mxu0 %v620
  %v688 = vpop.f32.mrb[0].mxu0
  %v689 = vadd.f32 0.0, %v688
  %v690 = vpop.f32.mrb[0].mxu0
  %v691 = vadd.f32 0.0, %v690
  %692 = vdwg.mxu0
  %v693 = vadd.f32 %v139, %v689
  %v694 = vadd.f32 %v141, %v691
  %v695 = vxor.u32 %v693, 2147483648
  %v696 = vxor.u32 %v694, 2147483648
  %v697 = vmul.f32 %v695, 1.442695
  %v698 = vpow.pop %v697
  %v699 = vmul.f32 %v696, 1.442695
  %v700 = vpow.pop %v699
  %v701 = vadd.f32 %v698, 1.0
  %v702 = vadd.f32 %v700, 1.0
  %v703 = vrcp.pop %v701
  %v704 = vmul.f32 1.0, %v703
  %v705 = vrcp.pop %v702
  %v706 = vmul.f32 1.0, %v705
  %v707 = vtanh.pop %v694
  %v709 = vrot.slane %v611, 6
  %v711 = vmul.f32 %v704, %v709
  %713 = vrot.lane.b32.xlu0 %v707, 64
  %v714 = vpop.permute.xlu0 %713
  %v716 = vmul.f32 %v704, %v714
  %718 = vrot.lane.b32.xlu0 %v716, 64
  %v719 = vpop.permute.xlu0 %718
  %v721 = vadd.f32 %v711, %v719
  %v722 = vtanh.pop %v721
  %724 = vrot.lane.b32.xlu0 %v722, 64
  %v725 = vpop.permute.xlu0 %724
  %v727 = vmul.f32 %v706, %v725
  %v729 = vsel %vm59, %v727, 0
  %731 = vmatprep.subr.mxu0 %v144
  %732 = vmatpush1.msra.mxu0 %v143
  %733 = vmatprep.subr.mxu0 %v146
  %734 = vmatpush1.msra.mxu0 %v145
  %735 = vmatprep.subr.mxu0 %v148
  %736 = vmatpush1.msra.mxu0 %v147
  %737 = vmatprep.subr.mxu0 %v150
  %738 = vmatpush1.msra.mxu0 %v149
  %739 = vmatprep.subr.mxu0 %v152
  %740 = vmatpush1.msra.mxu0 %v151
  %741 = vmatprep.subr.mxu0 %v154
  %742 = vmatpush1.msra.mxu0 %v153
  %743 = vmatprep.subr.mxu0 %v156
  %744 = vmatpush1.msra.mxu0 %v155
  %745 = vmatprep.subr.mxu0 %v158
  %746 = vmatpush1.msra.mxu0 %v157
  %747 = vmatprep.subr.mxu0 0.0
  %748 = vmatpush1.msra.mxu0 0.0
  %749 = vmatprep.subr.mxu0 0.0
  %750 = vmatpush1.msra.mxu0 0.0
  %751 = vmatprep.subr.mxu0 0.0
  %752 = vmatpush1.msra.mxu0 0.0
  %753 = vmatprep.subr.mxu0 0.0
  %754 = vmatpush1.msra.mxu0 0.0
  %755 = vmatprep.subr.mxu0 0.0
  %756 = vmatpush1.msra.mxu0 0.0
  %757 = vmatprep.subr.mxu0 0.0
  %758 = vmatpush1.msra.mxu0 0.0
  %759 = vmatprep.subr.mxu0 0.0
  %760 = vmatpush1.msra.mxu0 0.0
  %761 = vmatprep.subr.mxu0 0.0
  %762 = vmatpush1.msra.mxu0 0.0
  %763 = vmatprep.subr.mxu0 0.0
  %764 = vmatpush1.msra.mxu0 0.0
  %765 = vmatprep.subr.mxu0 0.0
  %766 = vmatpush1.msra.mxu0 0.0
  %767 = vmatprep.subr.mxu0 0.0
  %768 = vmatpush1.msra.mxu0 0.0
  %769 = vmatprep.subr.mxu0 0.0
  %770 = vmatpush1.msra.mxu0 0.0
  %771 = vmatprep.subr.mxu0 0.0
  %772 = vmatpush1.msra.mxu0 0.0
  %773 = vmatprep.subr.mxu0 0.0
  %774 = vmatpush1.msra.mxu0 0.0
  %775 = vmatprep.subr.mxu0 0.0
  %776 = vmatpush1.msra.mxu0 0.0
  %777 = vmatprep.subr.mxu0 0.0
  %778 = vmatpush1.msra.mxu0 0.0
  %779 = vmatprep.subr.mxu0 0.0
  %780 = vmatpush1.msra.mxu0 0.0
  %781 = vmatprep.subr.mxu0 0.0
  %782 = vmatpush1.msra.mxu0 0.0
  %783 = vmatprep.subr.mxu0 0.0
  %784 = vmatpush1.msra.mxu0 0.0
  %785 = vmatprep.subr.mxu0 0.0
  %786 = vmatpush1.msra.mxu0 0.0
  %787 = vmatprep.subr.mxu0 0.0
  %788 = vmatpush1.msra.mxu0 0.0
  %789 = vmatprep.subr.mxu0 0.0
  %790 = vmatpush1.msra.mxu0 0.0
  %791 = vmatprep.subr.mxu0 0.0
  %792 = vmatpush1.msra.mxu0 0.0
  %793 = vmatprep.subr.mxu0 0.0
  %794 = vmatpush1.msra.mxu0 0.0
  %795 = vmatprep.mubr.f32.mxu0 0.0
  %796 = vmatmul.mubr.f32.gmra.mrb[0].mxu0 %v729
  %v797 = vpop.f32.mrb[0].mxu0
  %v798 = vadd.f32 0.0, %v797
  %v799 = vpop.f32.mrb[0].mxu0
  %v800 = vadd.f32 0.0, %v799
  %801 = vdwg.mxu0
  %v804 = vrot.slane %v798, 6
  %v805 = vrot.slane %v800, 6
  %v808 = vadd.f32 %v139, %v804
  %v809 = vadd.f32 %v141, %v805
  %v810 = vxor.u32 %v808, 2147483648
  %v811 = vxor.u32 %v809, 2147483648
  %v812 = vmul.f32 %v810, 1.442695
  %v813 = vpow.pop %v812
  %v814 = vmul.f32 %v811, 1.442695
  %v815 = vpow.pop %v814
  %v816 = vadd.f32 %v813, 1.0
  %v817 = vadd.f32 %v815, 1.0
  %v818 = vrcp.pop %v816
  %v819 = vmul.f32 1.0, %v818
  %v820 = vrcp.pop %v817
  %v821 = vmul.f32 1.0, %v820
  %v822 = vtanh.pop %v809
  %v824 = vrot.slane %v721, 6
  %v826 = vmul.f32 %v819, %v824
  %828 = vrot.lane.b32.xlu0 %v822, 64
  %v829 = vpop.permute.xlu0 %828
  %v831 = vmul.f32 %v819, %v829
  %833 = vrot.lane.b32.xlu0 %v831, 64
  %v834 = vpop.permute.xlu0 %833
  %v836 = vadd.f32 %v826, %v834
  %v837 = vtanh.pop %v836
  %839 = vrot.lane.b32.xlu0 %v837, 64
  %v840 = vpop.permute.xlu0 %839
  %v842 = vmul.f32 %v821, %v840
  %v844 = vrot.slane %v842, 2
  %v845 = vsel %vm59, %v844, 0
  %847 = vmatprep.subr.mxu0 %v144
  %848 = vmatpush1.msra.mxu0 %v143
  %849 = vmatprep.subr.mxu0 %v146
  %850 = vmatpush1.msra.mxu0 %v145
  %851 = vmatprep.subr.mxu0 %v148
  %852 = vmatpush1.msra.mxu0 %v147
  %853 = vmatprep.subr.mxu0 %v150
  %854 = vmatpush1.msra.mxu0 %v149
  %855 = vmatprep.subr.mxu0 %v152
  %856 = vmatpush1.msra.mxu0 %v151
  %857 = vmatprep.subr.mxu0 %v154
  %858 = vmatpush1.msra.mxu0 %v153
  %859 = vmatprep.subr.mxu0 %v156
  %860 = vmatpush1.msra.mxu0 %v155
  %861 = vmatprep.subr.mxu0 %v158
  %862 = vmatpush1.msra.mxu0 %v157
  %863 = vmatprep.subr.mxu0 0.0
  %864 = vmatpush1.msra.mxu0 0.0
  %865 = vmatprep.subr.mxu0 0.0
  %866 = vmatpush1.msra.mxu0 0.0
  %867 = vmatprep.subr.mxu0 0.0
  %868 = vmatpush1.msra.mxu0 0.0
  %869 = vmatprep.subr.mxu0 0.0
  %870 = vmatpush1.msra.mxu0 0.0
  %871 = vmatprep.subr.mxu0 0.0
  %872 = vmatpush1.msra.mxu0 0.0
  %873 = vmatprep.subr.mxu0 0.0
  %874 = vmatpush1.msra.mxu0 0.0
  %875 = vmatprep.subr.mxu0 0.0
  %876 = vmatpush1.msra.mxu0 0.0
  %877 = vmatprep.subr.mxu0 0.0
  %878 = vmatpush1.msra.mxu0 0.0
  %879 = vmatprep.subr.mxu0 0.0
  %880 = vmatpush1.msra.mxu0 0.0
  %881 = vmatprep.subr.mxu0 0.0
  %882 = vmatpush1.msra.mxu0 0.0
  %883 = vmatprep.subr.mxu0 0.0
  %884 = vmatpush1.msra.mxu0 0.0
  %885 = vmatprep.subr.mxu0 0.0
  %886 = vmatpush1.msra.mxu0 0.0
  %887 = vmatprep.subr.mxu0 0.0
  %888 = vmatpush1.msra.mxu0 0.0
  %889 = vmatprep.subr.mxu0 0.0
  %890 = vmatpush1.msra.mxu0 0.0
  %891 = vmatprep.subr.mxu0 0.0
  %892 = vmatpush1.msra.mxu0 0.0
  %893 = vmatprep.subr.mxu0 0.0
  %894 = vmatpush1.msra.mxu0 0.0
  %895 = vmatprep.subr.mxu0 0.0
  %896 = vmatpush1.msra.mxu0 0.0
  %897 = vmatprep.subr.mxu0 0.0
  %898 = vmatpush1.msra.mxu0 0.0
  %899 = vmatprep.subr.mxu0 0.0
  %900 = vmatpush1.msra.mxu0 0.0
  %901 = vmatprep.subr.mxu0 0.0
  %902 = vmatpush1.msra.mxu0 0.0
  %903 = vmatprep.subr.mxu0 0.0
  %904 = vmatpush1.msra.mxu0 0.0
  %905 = vmatprep.subr.mxu0 0.0
  %906 = vmatpush1.msra.mxu0 0.0
  %907 = vmatprep.subr.mxu0 0.0
  %908 = vmatpush1.msra.mxu0 0.0
  %909 = vmatprep.subr.mxu0 0.0
  %910 = vmatpush1.msra.mxu0 0.0
  %911 = vmatprep.mubr.f32.mxu0 0.0
  %912 = vmatmul.mubr.f32.gmra.mrb[0].mxu0 %v845
  %v913 = vpop.f32.mrb[0].mxu0
  %v914 = vadd.f32 0.0, %v913
  %v915 = vpop.f32.mrb[0].mxu0
  %v916 = vadd.f32 0.0, %v915
  %917 = vdwg.mxu0
  %v920 = vrot.slane %v914, 4
  %v921 = vrot.slane %v916, 4
  %v924 = vadd.f32 %v139, %v920
  %v925 = vadd.f32 %v141, %v921
  %v926 = vxor.u32 %v924, 2147483648
  %v927 = vxor.u32 %v925, 2147483648
  %v928 = vmul.f32 %v926, 1.442695
  %v929 = vpow.pop %v928
  %v930 = vmul.f32 %v927, 1.442695
  %v931 = vpow.pop %v930
  %v932 = vadd.f32 %v929, 1.0
  %v933 = vadd.f32 %v931, 1.0
  %v934 = vrcp.pop %v932
  %v935 = vmul.f32 1.0, %v934
  %v936 = vrcp.pop %v933
  %v937 = vmul.f32 1.0, %v936
  %v938 = vtanh.pop %v925
  %v940 = vrot.slane %v836, 6
  %v942 = vmul.f32 %v935, %v940
  %944 = vrot.lane.b32.xlu0 %v938, 64
  %v945 = vpop.permute.xlu0 %944
  %v947 = vmul.f32 %v935, %v945
  %949 = vrot.lane.b32.xlu0 %v947, 64
  %v950 = vpop.permute.xlu0 %949
  %v952 = vadd.f32 %v942, %v950
  %v953 = vtanh.pop %v952
  %955 = vrot.lane.b32.xlu0 %v953, 64
  %v956 = vpop.permute.xlu0 %955
  %v958 = vmul.f32 %v937, %v956
  %v960 = vrot.slane %v958, 4
  %v961 = vsel %vm59, %v960, 0
  %963 = vmatprep.subr.mxu0 %v144
  %964 = vmatpush1.msra.mxu0 %v143
  %965 = vmatprep.subr.mxu0 %v146
  %966 = vmatpush1.msra.mxu0 %v145
  %967 = vmatprep.subr.mxu0 %v148
  %968 = vmatpush1.msra.mxu0 %v147
  %969 = vmatprep.subr.mxu0 %v150
  %970 = vmatpush1.msra.mxu0 %v149
  %971 = vmatprep.subr.mxu0 %v152
  %972 = vmatpush1.msra.mxu0 %v151
  %973 = vmatprep.subr.mxu0 %v154
  %974 = vmatpush1.msra.mxu0 %v153
  %975 = vmatprep.subr.mxu0 %v156
  %976 = vmatpush1.msra.mxu0 %v155
  %977 = vmatprep.subr.mxu0 %v158
  %978 = vmatpush1.msra.mxu0 %v157
  %979 = vmatprep.subr.mxu0 0.0
  %980 = vmatpush1.msra.mxu0 0.0
  %981 = vmatprep.subr.mxu0 0.0
  %982 = vmatpush1.msra.mxu0 0.0
  %983 = vmatprep.subr.mxu0 0.0
  %984 = vmatpush1.msra.mxu0 0.0
  %985 = vmatprep.subr.mxu0 0.0
  %986 = vmatpush1.msra.mxu0 0.0
  %987 = vmatprep.subr.mxu0 0.0
  %988 = vmatpush1.msra.mxu0 0.0
  %989 = vmatprep.subr.mxu0 0.0
  %990 = vmatpush1.msra.mxu0 0.0
  %991 = vmatprep.subr.mxu0 0.0
  %992 = vmatpush1.msra.mxu0 0.0
  %993 = vmatprep.subr.mxu0 0.0
  %994 = vmatpush1.msra.mxu0 0.0
  %995 = vmatprep.subr.mxu0 0.0
  %996 = vmatpush1.msra.mxu0 0.0
  %997 = vmatprep.subr.mxu0 0.0
  %998 = vmatpush1.msra.mxu0 0.0
  %999 = vmatprep.subr.mxu0 0.0
  %1000 = vmatpush1.msra.mxu0 0.0
  %1001 = vmatprep.subr.mxu0 0.0
  %1002 = vmatpush1.msra.mxu0 0.0
  %1003 = vmatprep.subr.mxu0 0.0
  %1004 = vmatpush1.msra.mxu0 0.0
  %1005 = vmatprep.subr.mxu0 0.0
  %1006 = vmatpush1.msra.mxu0 0.0
  %1007 = vmatprep.subr.mxu0 0.0
  %1008 = vmatpush1.msra.mxu0 0.0
  %1009 = vmatprep.subr.mxu0 0.0
  %1010 = vmatpush1.msra.mxu0 0.0
  %1011 = vmatprep.subr.mxu0 0.0
  %1012 = vmatpush1.msra.mxu0 0.0
  %1013 = vmatprep.subr.mxu0 0.0
  %1014 = vmatpush1.msra.mxu0 0.0
  %1015 = vmatprep.subr.mxu0 0.0
  %1016 = vmatpush1.msra.mxu0 0.0
  %1017 = vmatprep.subr.mxu0 0.0
  %1018 = vmatpush1.msra.mxu0 0.0
  %1019 = vmatprep.subr.mxu0 0.0
  %1020 = vmatpush1.msra.mxu0 0.0
  %1021 = vmatprep.subr.mxu0 0.0
  %1022 = vmatpush1.msra.mxu0 0.0
  %1023 = vmatprep.subr.mxu0 0.0
  %1024 = vmatpush1.msra.mxu0 0.0
  %1025 = vmatprep.subr.mxu0 0.0
  %1026 = vmatpush1.msra.mxu0 0.0
  %1027 = vmatprep.mubr.f32.mxu0 0.0
  %1028 = vmatmul.mubr.f32.gmra.mrb[0].mxu0 %v961
  %v1029 = vpop.f32.mrb[0].mxu0
  %v1030 = vadd.f32 0.0, %v1029
  %v1031 = vpop.f32.mrb[0].mxu0
  %v1032 = vadd.f32 0.0, %v1031
  %1033 = vdwg.mxu0
  %v1036 = vrot.slane %v1030, 2
  %v1037 = vrot.slane %v1032, 2
  %v1040 = vadd.f32 %v139, %v1036
  %v1041 = vadd.f32 %v141, %v1037
  %v1042 = vxor.u32 %v1040, 2147483648
  %v1043 = vxor.u32 %v1041, 2147483648
  %v1044 = vmul.f32 %v1042, 1.442695
  %v1045 = vpow.pop %v1044
  %v1046 = vmul.f32 %v1043, 1.442695
  %v1047 = vpow.pop %v1046
  %v1048 = vadd.f32 %v1045, 1.0
  %v1049 = vadd.f32 %v1047, 1.0
  %v1050 = vrcp.pop %v1048
  %v1051 = vmul.f32 1.0, %v1050
  %v1052 = vrcp.pop %v1049
  %v1053 = vmul.f32 1.0, %v1052
  %v1054 = vtanh.pop %v1041
  %v1056 = vrot.slane %v952, 6
  %v1058 = vmul.f32 %v1051, %v1056
  %1060 = vrot.lane.b32.xlu0 %v1054, 64
  %v1061 = vpop.permute.xlu0 %1060
  %v1063 = vmul.f32 %v1051, %v1061
  %1065 = vrot.lane.b32.xlu0 %v1063, 64
  %v1066 = vpop.permute.xlu0 %1065
  %v1068 = vadd.f32 %v1058, %v1066
  %v1069 = vtanh.pop %v1068
  %1071 = vrot.lane.b32.xlu0 %v1069, 64
  %v1072 = vpop.permute.xlu0 %1071
  %v1074 = vmul.f32 %v1053, %v1072
  %vm1075 = vcmask 1041408
  %v1076 = vsel %vm1075, %v270, %v385
  %vm1077 = vcmask 1043456
  %v1078 = vsel %vm1077, %v1076, %v501
  %vm1079 = vcmask 1045504
  %v1080 = vsel %vm1079, %v1078, %v617
  %v1081 = vsel %vm1075, %v727, %v842
  %v1082 = vsel %vm1077, %v1081, %v958
  %v1083 = vsel %vm1079, %v1082, %v1074
  %v1085 = vrot.slane %v1074, 6
  %v1087 = vrot.slane %v958, 2
  %v1089 = vrot.slane %v842, 6
  %v1091 = vrot.slane %v727, 2
  %v1094 = vrot.slane %v501, 2
  %v1096 = vrot.slane %v385, 6
  %v1098 = vrot.slane %v270, 2
  %v1100 = vsel %vm1075, %v1085, %v1087
  %v1101 = vsel %vm1077, %v1100, %v1089
  %v1102 = vsel %vm1079, %v1101, %v1091
  %v1103 = vsel %vm1075, %v619, %v1094
  %v1104 = vsel %vm1077, %v1103, %v1096
  %v1105 = vsel %vm1079, %v1104, %v1098
  %vm1106 = vcmask 261120
  %v1107 = vsel %vm1106, %v1080, %v1102
  %v1108 = vsel %vm1106, %v1083, %v1105
  %v1109 = vld [vmem:[%s6] sm:$0xff]
  %v1110 = vld [vmem:[%s6 + $0x8] sm:$0xff]
  %v1111 = vld [vmem:[%s6 + $0x10] sm:$0xff]
  %v1112 = vld [vmem:[%s6 + $0x18] sm:$0xff]
  %v1113 = vld [vmem:[%s6 + $0x20] sm:$0xff]
  %v1114 = vld [vmem:[%s6 + $0x28] sm:$0xff]
  %v1115 = vld [vmem:[%s6 + $0x30] sm:$0xff]
  %v1116 = vld [vmem:[%s6 + $0x38] sm:$0xff]
  %v1117 = vld [vmem:[%s7] sm:$0x1]
  %v1119 = vlaneseq
  %v1120 = vshrl.u32 %v1119, 7
  %v1121 = vsub.s32 0, %v1120
  %v1122 = vrot.slane %v1117, %v1121
  %v1125 = vsel %vm59, %v1107, 0
  %v1128 = vsel %vm59, %v1108, 0
  %1130 = vmatprep.subr.mxu0 0.0
  %1131 = vmatpush1.msra.mxu0 %v1109
  %1132 = vmatprep.subr.mxu0 0.0
  %1133 = vmatpush1.msra.mxu0 %v1110
  %1134 = vmatprep.subr.mxu0 0.0
  %1135 = vmatpush1.msra.mxu0 %v1111
  %1136 = vmatprep.subr.mxu0 0.0
  %1137 = vmatpush1.msra.mxu0 %v1112
  %1138 = vmatprep.subr.mxu0 0.0
  %1139 = vmatpush1.msra.mxu0 %v1113
  %1140 = vmatprep.subr.mxu0 0.0
  %1141 = vmatpush1.msra.mxu0 %v1114
  %1142 = vmatprep.subr.mxu0 0.0
  %1143 = vmatpush1.msra.mxu0 %v1115
  %1144 = vmatprep.subr.mxu0 0.0
  %1145 = vmatpush1.msra.mxu0 %v1116
  %1146 = vmatprep.subr.mxu0 0.0
  %1147 = vmatpush1.msra.mxu0 0.0
  %1148 = vmatprep.subr.mxu0 0.0
  %1149 = vmatpush1.msra.mxu0 0.0
  %1150 = vmatprep.subr.mxu0 0.0
  %1151 = vmatpush1.msra.mxu0 0.0
  %1152 = vmatprep.subr.mxu0 0.0
  %1153 = vmatpush1.msra.mxu0 0.0
  %1154 = vmatprep.subr.mxu0 0.0
  %1155 = vmatpush1.msra.mxu0 0.0
  %1156 = vmatprep.subr.mxu0 0.0
  %1157 = vmatpush1.msra.mxu0 0.0
  %1158 = vmatprep.subr.mxu0 0.0
  %1159 = vmatpush1.msra.mxu0 0.0
  %1160 = vmatprep.subr.mxu0 0.0
  %1161 = vmatpush1.msra.mxu0 0.0
  %1162 = vmatprep.subr.mxu0 0.0
  %1163 = vmatpush1.msra.mxu0 0.0
  %1164 = vmatprep.subr.mxu0 0.0
  %1165 = vmatpush1.msra.mxu0 0.0
  %1166 = vmatprep.subr.mxu0 0.0
  %1167 = vmatpush1.msra.mxu0 0.0
  %1168 = vmatprep.subr.mxu0 0.0
  %1169 = vmatpush1.msra.mxu0 0.0
  %1170 = vmatprep.subr.mxu0 0.0
  %1171 = vmatpush1.msra.mxu0 0.0
  %1172 = vmatprep.subr.mxu0 0.0
  %1173 = vmatpush1.msra.mxu0 0.0
  %1174 = vmatprep.subr.mxu0 0.0
  %1175 = vmatpush1.msra.mxu0 0.0
  %1176 = vmatprep.subr.mxu0 0.0
  %1177 = vmatpush1.msra.mxu0 0.0
  %1178 = vmatprep.subr.mxu0 0.0
  %1179 = vmatpush1.msra.mxu0 0.0
  %1180 = vmatprep.subr.mxu0 0.0
  %1181 = vmatpush1.msra.mxu0 0.0
  %1182 = vmatprep.subr.mxu0 0.0
  %1183 = vmatpush1.msra.mxu0 0.0
  %1184 = vmatprep.subr.mxu0 0.0
  %1185 = vmatpush1.msra.mxu0 0.0
  %1186 = vmatprep.subr.mxu0 0.0
  %1187 = vmatpush1.msra.mxu0 0.0
  %1188 = vmatprep.subr.mxu0 0.0
  %1189 = vmatpush1.msra.mxu0 0.0
  %1190 = vmatprep.subr.mxu0 0.0
  %1191 = vmatpush1.msra.mxu0 0.0
  %1192 = vmatprep.subr.mxu0 0.0
  %1193 = vmatpush1.msra.mxu0 0.0
  %1194 = vmatprep.mubr.f32.mxu0 0.0
  %1195 = vmatmul.mubr.f32.gmra.mrb[0].mxu0 %v1125
  %v1196 = vpop.f32.mrb[0].mxu0
  %v1197 = vadd.f32 %v1122, %v1196
  %v1198 = vpop.f32.mrb[0].mxu0
  %1199 = vmatprep.mubr.f32.mxu0 0.0
  %1200 = vmatmul.mubr.f32.gmra.mrb[0].mxu0 %v1128
  %v1201 = vpop.f32.mrb[0].mxu0
  %v1202 = vadd.f32 %v1122, %v1201
  %v1203 = vpop.f32.mrb[0].mxu0
  %1204 = vdwg.mxu0
  %1205 = vst [vmem:[%s8] sm:$0xff] %v1197
  %1206 = vst [vmem:[%s8 + $0x8] sm:$0xff] %v1202
  // Predicated region
  $region34: #{forward.1} parent=0 // pred_check
    _
  $region35: #{forward.1} parent=0 // pred_check_branch
    %1208 = sbr.rel (0) target = $region37
  $region36: #{forward.1} parent=0 // pred_region
    _
  $region37: #{forward.1} parent=0 // pred_fallthru
    _
  // Predicated region
  $region38: #{forward.1} parent=0 // pred_check
    _
  $region39: #{forward.1} parent=0 // pred_check_branch
    %1210 = sbr.rel (0) target = $region41
  $region40: #{forward.1} parent=0 // pred_region
    _
  $region41: #{forward.1} parent=0 // pred_fallthru
    _

</llo_original>
